<compile_context>
chip_gen: v7x
topology: tpu7x:2x2x1
jax: 0.10.0
libtpu: 0.0.40
codegen_flags: <defaults>
</compile_context>

<pallas_src>
from functools import partial

import jax
import jax.numpy as jnp
import numpy as np
from jax.experimental import pallas as pl
from jax.experimental.pallas import tpu as pltpu


def _mixed_attn_kernel(
    ybar_ref, yl_ref, z_ref,        # per-(batch, n-tile) blocks: (1,tN,K*D'), (1,tN,K*R'), (1,R',tN,M)
    xbarT_ref, xlT_ref, xproj_ref,  # per-batch blocks: (1,K*D',M), (1,K*R',M), (1,M,K*D)
    thy_ref, etao_ref,              # packed weights: (K*D,Qpad), (1,Qpad)
    out_ref,                        # (1,tN,Qpad)
    *, K, Dp, D, Rp, bf16_compute):
    f32 = jnp.float32
    mxu_dtype = jnp.bfloat16 if bf16_compute else f32

    ybar = ybar_ref[0]      # (tN, K*D')   already scaled by 1/temp (and bf16 if requested)
    yl = yl_ref[0]          # (tN, K*R')   f32, 1/temp folded
    xbarT = xbarT_ref[0]    # (K*D', M)
    xlT = xlT_ref[0]        # (K*R', M)    f32, 1/temp folded
    xproj = xproj_ref[0]    # (M, K*D)

    ctxs = []
    for k in range(K):
        # Mixed-attention score in (N, M) orientation: canonical MXU matmul.
        score = jnp.dot(ybar[:, k * Dp:(k + 1) * Dp],
                        xbarT[k * Dp:(k + 1) * Dp, :],
                        preferred_element_type=f32)                       # (tN, M)
        # Fused y-edge + x-edge bias terms: one multiply-add pass over z per (k, r).
        for r in range(Rp):
            j = k * Rp + r
            coef = yl[:, j:j + 1] + xlT[j:j + 1, :]                       # (tN,1)+(1,M) broadcast
            score = score + z_ref[0, r].astype(f32) * coef                # z read from VMEM ref

        # Softmax over keys (lane axis), un-normalized.
        m_ = jnp.max(score, axis=-1, keepdims=True)
        e = jnp.exp(score - m_)
        denom = jnp.sum(e, axis=-1, keepdims=True)

        # Flash normalization: contract first, scale the small (tN, D) context afterwards.
        ctx = jnp.dot(e.astype(mxu_dtype), xproj[:, k * D:(k + 1) * D],
                      preferred_element_type=f32)                         # (tN, D)
        ctxs.append(ctx * pl.reciprocal(denom, approx=True))

    # One wide head-mixing matmul over all heads (fills the MXU contraction depth).
    ctx_all = jnp.concatenate(ctxs, axis=-1)                              # (tN, K*D)
    out = jnp.dot(ctx_all.astype(mxu_dtype), thy_ref[...],
                  preferred_element_type=f32) + etao_ref[...]
    out_ref[0] = out.astype(out_ref.dtype)


def _pack_heads_last(w):
    """(K, A, B) -> (A, K*B) with out[a, k*B + b] = w[k, a, b]."""
    K, A, B = w.shape
    return jnp.transpose(w, (1, 0, 2)).reshape(A, K * B)


def _block_diag(w):
    """(K, A, B) -> (K*A, K*B) block-diagonal with out[k*A+a, k*B+b] = w[k, a, b]."""
    K, A, B = w.shape
    eye = jnp.eye(K, dtype=w.dtype)
    return jnp.einsum('kab,kl->kalb', w, eye).reshape(K * A, K * B)


def _default_vmem_limit_bytes():
    """Generation-aware scoped-VMEM limit (v7x has only 64 MiB per TensorCore)."""
    try:
        cap = int(pltpu.get_tpu_info().vmem_capacity_bytes)
    except Exception:
        cap = 128 * 1024 * 1024
    return max(32 * 1024 * 1024, min((cap * 3) // 4, 100 * 1024 * 1024))


def mixed_attention(z, yq, xk, xv, params, *, tile_n=None, cast_to_bf16=False,
                    vmem_limit_bytes=None, out_dtype=jnp.float32):
    """z':(B,M,N,R'), y':(B,N,Q'), x':(B,M,P'), x:(B,M,P) -> y:(B,N,Q)."""
    B, M, N, Rp = z.shape
    K, _, Dp = params['lamx'].shape
    D = params['thx'].shape[-1]
    Q = params['thy'].shape[1]
    inv_temp = 1.0 / float(np.sqrt(np.float32(Dp)))
    Q_pad = ((Q + 127) // 128) * 128                      # lane-dense output stores
    f32 = jnp.float32

    if vmem_limit_bytes is None:
        vmem_limit_bytes = _default_vmem_limit_bytes()

    # ---- wrapper-side head packing & per-batch precompute (done ONCE, not per N-tile) ----
    lamx_f = _pack_heads_last(params['lamx'].astype(f32))                 # (P', K*D')
    bx_f = params['bx'].astype(f32).reshape(1, K * Dp)                    # (1,  K*D')
    lamy_f = _pack_heads_last(params['lamy'].astype(f32))                 # (Q', K*D')
    by_f = params['by'].astype(f32).reshape(1, K * Dp)                    # (1,  K*D')
    lzx_bd = _block_diag(jnp.transpose(params['lzx'].astype(f32), (0, 2, 1)))   # (K*D', K*R')
    lzy_bd = _block_diag(params['lzy'].astype(f32))                       # (K*R', K*D')
    thx_f = _pack_heads_last(params['thx'].astype(f32))                   # (P,  K*D)
    etax_f = params['etax'].astype(f32).reshape(1, K * D)                 # (1,  K*D)
    thy_f = jnp.transpose(params['thy'].astype(f32), (0, 2, 1)).reshape(K * D, Q)
    thy_f = jnp.pad(thy_f, ((0, 0), (0, Q_pad - Q)))                      # (K*D, Qpad)
    etao_p = jnp.pad(params['etao'].astype(f32), ((0, 0), (0, Q_pad - Q)))  # (1, Qpad)

    # Per-batch projections (small relative to the z' tensor; computed once in XLA).
    xbar = jnp.einsum('bmp,pc->bmc', xk.astype(f32), lamx_f) + bx_f            # (B, M, K*D')
    ybar = (jnp.einsum('bnq,qc->bnc', yq.astype(f32), lamy_f) + by_f) * inv_temp  # (B, N, K*D')
    yl = jnp.einsum('bnc,cj->bnj', ybar, lzx_bd)                               # (B, N, K*R')  1/temp folded
    xl_t = jnp.einsum('jc,bmc->bjm', lzy_bd, xbar) * inv_temp                  # (B, K*R', M)  1/temp folded
    xbar_t = jnp.transpose(xbar, (0, 2, 1))                                    # (B, K*D', M)
    xproj = jnp.einsum('bmp,pc->bmc', xv.astype(f32), thx_f) + etax_f          # (B, M, K*D)

    # z' -> (B, R', N, M): R' off the lane axis, key dim M (softmax/contraction dim) on lanes.
    z_t = jnp.transpose(z, (0, 3, 2, 1)).astype(f32)

    if cast_to_bf16:
        bf16 = jnp.bfloat16
        z_t = z_t.astype(bf16)
        ybar = ybar.astype(bf16)      # MXU operand (score matmul)
        xbar_t = xbar_t.astype(bf16)  # MXU operand (score matmul)
        xproj = xproj.astype(bf16)    # MXU operand (ctx matmul)
        thy_f = thy_f.astype(bf16)    # MXU operand (head-mixing matmul)
        # yl / xl_t stay f32: they feed VPU adds (v5e has no bf16 VALU).

    # ---- N tiling: "parallel" grid axis; sized from the VMEM budget ----
    if tile_n is None:
        z_elt = 2 if cast_to_bf16 else 4
        per_row = (Rp * M * z_elt * 2          # z block (double-buffered)
                   + 2 * Q_pad * 4             # output block (double-buffered)
                   + (K * Dp + K * Rp) * 4     # ybar / yl blocks
                   + 4 * M * 4)                # in-kernel (tN, M) f32 temporaries
        cap = max(8, int(vmem_limit_bytes * 0.5) // max(per_row, 1))
        cap = min(cap, 512)
        if N <= cap:
            tile_n = N
        else:
            tile_n = N
            t = (cap // 8) * 8
            while t >= 8:
                if N % t == 0:
                    tile_n = t
                    break
                t -= 8
    assert N % tile_n == 0 and (tile_n == N or tile_n % 8 == 0)
    n_tiles = N // tile_n

    in_specs = [
        pl.BlockSpec((1, tile_n, K * Dp), lambda b, n: (b, n, 0)),       # ybar (scaled)
        pl.BlockSpec((1, tile_n, K * Rp), lambda b, n: (b, n, 0)),       # yl
        pl.BlockSpec((1, Rp, tile_n, M), lambda b, n: (b, 0, n, 0)),     # z' transposed
        pl.BlockSpec((1, K * Dp, M), lambda b, n: (b, 0, 0)),            # xbar^T (per batch)
        pl.BlockSpec((1, K * Rp, M), lambda b, n: (b, 0, 0)),            # xl^T   (per batch)
        pl.BlockSpec((1, M, K * D), lambda b, n: (b, 0, 0)),             # xproj  (per batch)
        pl.BlockSpec((K * D, Q_pad), lambda b, n: (0, 0)),               # Theta(y) packed+padded
        pl.BlockSpec((1, Q_pad), lambda b, n: (0, 0)),                   # eta(o) padded
    ]
    out_spec = pl.BlockSpec((1, tile_n, Q_pad), lambda b, n: (b, n, 0))

    out_padded = pl.pallas_call(
        partial(_mixed_attn_kernel, K=K, Dp=Dp, D=D, Rp=Rp, bf16_compute=cast_to_bf16),
        out_shape=jax.ShapeDtypeStruct((B, N, Q_pad), out_dtype),
        grid_spec=pltpu.PrefetchScalarGridSpec(
            num_scalar_prefetch=0,
            grid=(B, n_tiles),
            in_specs=in_specs,
            out_specs=out_spec,
        ),
        compiler_params=pltpu.CompilerParams(
            dimension_semantics=("parallel", "parallel"),
            vmem_limit_bytes=int(vmem_limit_bytes),
        ),
    )(ybar, yl, z_t, xbar_t, xl_t, xproj, thy_f, etao_p)

    return out_padded[:, :, :Q]


def reference(z, yq, xk, xv, params, temperature):
    """Pure-JAX mirror of the PyTorch forward (same einsums)."""
    xbar = jnp.einsum('kpd,bmp->bkmd', params['lamx'], xk) + params['bx'][None]   # (B,K,M,D')
    ybar = jnp.einsum('kqd,bnq->bknd', params['lamy'], yq) + params['by'][None]   # (B,K,N,D')
    r = jnp.einsum('bkmd,bknd->bkmn', xbar, ybar)
    zbar = jnp.einsum('krd,bmnr->bkmnd', params['lzx'], z)
    r = r + jnp.einsum('bknd,bkmnd->bkmn', ybar, zbar)
    zbar = jnp.einsum('krd,bmnr->bkmnd', params['lzy'], z)
    r = r + jnp.einsum('bkmd,bkmnd->bkmn', xbar, zbar)
    attn = jax.nn.softmax(r / temperature, axis=-2)                                # softmax over M
    xproj = jnp.einsum('kpd,bmp->bkmd', params['thx'], xv) + params['etax'][None]
    ctx = jnp.einsum('bkmn,bkmd->bknd', attn, xproj)
    out = jnp.einsum('kqd,bknd->bnq', params['thy'], ctx) + params['etao'][None]
    return out


if __name__ == "__main__":
    # Small, consistent shapes: B=2 batch, K=2 heads, M=16 keys, N=8 queries,
    # P=Q=16 value/output dims (D=Q//K=8), P'=12 key dim, Q'=16 query dim (D'=Q'//K=8), R'=4 edge dim.
    B, K, M, N = 2, 2, 16, 8
    P, Q, D = 16, 16, 8
    Pp, Qp, Dp = 12, 16, 8
    Rp = 4

    key = jax.random.PRNGKey(0)
    keys = jax.random.split(key, 16)

    def init(k, shape, scale):
        return scale * jax.random.normal(k, shape, dtype=jnp.float32)

    # Deterministic synthetic parameters (shapes match the torch module's parameters;
    # biases are given small nonzero values to exercise the bias-add paths).
    params = {
        'lamx': init(keys[0], (K, Pp, Dp), 0.2),   # Lambda(x)  : (K, P', D')
        'bx':   init(keys[1], (K, 1, Dp), 0.05),   # beta(x)    : (1, K, 1, D') stored as (K,1,D')
        'lamy': init(keys[2], (K, Qp, Dp), 0.2),   # Lambda(y)  : (K, Q', D')
        'by':   init(keys[3], (K, 1, Dp), 0.05),   # beta(y)
        'lzx':  init(keys[4], (K, Rp, Dp), 0.2),   # Lambda(zx) : (K, R', D')
        'lzy':  init(keys[5], (K, Rp, Dp), 0.2),   # Lambda(zy)
        'thx':  init(keys[6], (K, P, D), 0.2),     # Theta(x)   : (K, P, D)
        'etax': init(keys[7], (K, 1, D), 0.05),    # eta        : (1, K, 1, D) stored as (K,1,D)
        'thy':  init(keys[8], (K, Q, D), 0.2),     # Theta(y)   : (K, Q, D)
        'etao': init(keys[9], (1, Q), 0.05),       # eta(o)     : (1, 1, Q) stored as (1,Q)
    }

    z = init(keys[10], (B, M, N, Rp), 1.0)     # edge input z'
    yq = init(keys[11], (B, N, Qp), 1.0)       # query input y'
    xk = init(keys[12], (B, M, Pp), 1.0)       # key input x'
    xv = init(keys[13], (B, M, P), 1.0)        # value input x

    out = mixed_attention(z, yq, xk, xv, params)
    out = jax.block_until_ready(out)

    ref = reference(z, yq, xk, xv, params, float(np.sqrt(np.float32(Dp))))
    # Tolerance allows for the approximate EUP reciprocal used in the softmax normalisation.
    np.testing.assert_allclose(np.asarray(out), np.asarray(ref), rtol=5e-3, atol=5e-3)

    # bf16 fast path (v6e/v7x): all MXU operands + z in bf16, f32 accumulation.
    out_bf16 = jax.block_until_ready(mixed_attention(z, yq, xk, xv, params, cast_to_bf16=True))
    assert np.all(np.isfinite(np.asarray(out_bf16)))
    assert float(np.max(np.abs(np.asarray(out_bf16) - np.asarray(ref)))) < 0.1

    print("KERNEL_OK")
</pallas_src>

<mosaic_0001>
module attributes {stable_mosaic.version = 11 : i64} {
  func.func @_mixed_attn_kernel(%arg0: i32, %arg1: i32, %arg2: memref<1x8x16xf32, #tpu.memory_space<vmem>>, %arg3: memref<1x8x8xf32, #tpu.memory_space<vmem>>, %arg4: memref<1x4x8x16xf32, #tpu.memory_space<vmem>>, %arg5: memref<1x16x16xf32, #tpu.memory_space<vmem>>, %arg6: memref<1x8x16xf32, #tpu.memory_space<vmem>>, %arg7: memref<1x16x16xf32, #tpu.memory_space<vmem>>, %arg8: memref<16x128xf32, #tpu.memory_space<vmem>>, %arg9: memref<1x128xf32, #tpu.memory_space<vmem>>, %arg10: memref<1x8x128xf32, #tpu.memory_space<vmem>>) attributes {dimension_semantics = [#tpu.dimension_semantics<parallel>, #tpu.dimension_semantics<parallel>], iteration_bounds = array<i64: 2, 1>, scalar_prefetch = 0 : i64, scratch_operands = 0 : i64, tpu.core_type = #tpu.core_type<tc>, window_params = [{transform_indices = @transform_0, window_bounds = array<i64: 1, 8, 16>}, {transform_indices = @transform_1, window_bounds = array<i64: 1, 8, 8>}, {transform_indices = @transform_2, window_bounds = array<i64: 1, 4, 8, 16>}, {transform_indices = @transform_3, window_bounds = array<i64: 1, 16, 16>}, {transform_indices = @transform_4, window_bounds = array<i64: 1, 8, 16>}, {transform_indices = @transform_5, window_bounds = array<i64: 1, 16, 16>}, {pipeline_mode = #tpu.pipeline_mode<synchronous>, transform_indices = @transform_6, window_bounds = array<i64: 16, 128>}, {pipeline_mode = #tpu.pipeline_mode<synchronous>, transform_indices = @transform_7, window_bounds = array<i64: 1, 128>}, {transform_indices = @transform_8, window_bounds = array<i64: 1, 8, 128>}]} {
    %c0 = arith.constant 0 : index
    %c0_0 = arith.constant 0 : index
    %c0_1 = arith.constant 0 : index
    %0 = vector.load %arg2[%c0, %c0_0, %c0_1] : memref<1x8x16xf32, #tpu.memory_space<vmem>>, vector<1x8x16xf32>
    %1 = vector.shape_cast %0 : vector<1x8x16xf32> to vector<8x16xf32>
    %c0_2 = arith.constant 0 : index
    %c0_3 = arith.constant 0 : index
    %c0_4 = arith.constant 0 : index
    %2 = vector.load %arg3[%c0_2, %c0_3, %c0_4] : memref<1x8x8xf32, #tpu.memory_space<vmem>>, vector<1x8x8xf32>
    %3 = vector.shape_cast %2 : vector<1x8x8xf32> to vector<8x8xf32>
    %c0_5 = arith.constant 0 : index
    %c0_6 = arith.constant 0 : index
    %c0_7 = arith.constant 0 : index
    %4 = vector.load %arg5[%c0_5, %c0_6, %c0_7] : memref<1x16x16xf32, #tpu.memory_space<vmem>>, vector<1x16x16xf32>
    %5 = vector.shape_cast %4 : vector<1x16x16xf32> to vector<16x16xf32>
    %c0_8 = arith.constant 0 : index
    %c0_9 = arith.constant 0 : index
    %c0_10 = arith.constant 0 : index
    %6 = vector.load %arg6[%c0_8, %c0_9, %c0_10] : memref<1x8x16xf32, #tpu.memory_space<vmem>>, vector<1x8x16xf32>
    %7 = vector.shape_cast %6 : vector<1x8x16xf32> to vector<8x16xf32>
    %c0_11 = arith.constant 0 : index
    %c0_12 = arith.constant 0 : index
    %c0_13 = arith.constant 0 : index
    %8 = vector.load %arg7[%c0_11, %c0_12, %c0_13] : memref<1x16x16xf32, #tpu.memory_space<vmem>>, vector<1x16x16xf32>
    %9 = vector.shape_cast %8 : vector<1x16x16xf32> to vector<16x16xf32>
    %10 = vector.extract_strided_slice %1 {offsets = [0, 0], sizes = [8, 8], strides = [1, 1]} : vector<8x16xf32> to vector<8x8xf32>
    %11 = vector.extract_strided_slice %5 {offsets = [0, 0], sizes = [8, 16], strides = [1, 1]} : vector<16x16xf32> to vector<8x16xf32>
    %cst = arith.constant dense<0.000000e+00> : vector<8x16xf32>
    %12 = tpu.matmul %10, %11, %cst {dimension_numbers = #tpu.dot_dimension_numbers<[1], [0], [0], [1], [0, 0, 1, 1], [], []>} : vector<8x8xf32>, vector<8x16xf32>, vector<8x16xf32> -> vector<8x16xf32>
    %13 = vector.extract_strided_slice %3 {offsets = [0, 0], sizes = [8, 1], strides = [1, 1]} : vector<8x8xf32> to vector<8x1xf32>
    %14 = vector.extract_strided_slice %7 {offsets = [0, 0], sizes = [1, 16], strides = [1, 1]} : vector<8x16xf32> to vector<1x16xf32>
    %15 = vector.broadcast %13 : vector<8x1xf32> to vector<8x16xf32>
    %16 = vector.broadcast %14 : vector<1x16xf32> to vector<8x16xf32>
    %17 = arith.addf %15, %16 : vector<8x16xf32>
    %c0_14 = arith.constant 0 : index
    %c0_15 = arith.constant 0 : index
    %c0_16 = arith.constant 0 : index
    %c0_17 = arith.constant 0 : index
    %18 = vector.load %arg4[%c0_14, %c0_15, %c0_16, %c0_17] : memref<1x4x8x16xf32, #tpu.memory_space<vmem>>, vector<1x1x8x16xf32>
    %19 = vector.shape_cast %18 : vector<1x1x8x16xf32> to vector<8x16xf32>
    %20 = arith.mulf %19, %17 : vector<8x16xf32>
    %21 = arith.addf %12, %20 : vector<8x16xf32>
    %22 = vector.extract_strided_slice %3 {offsets = [0, 1], sizes = [8, 1], strides = [1, 1]} : vector<8x8xf32> to vector<8x1xf32>
    %23 = vector.extract_strided_slice %7 {offsets = [1, 0], sizes = [1, 16], strides = [1, 1]} : vector<8x16xf32> to vector<1x16xf32>
    %24 = vector.broadcast %22 : vector<8x1xf32> to vector<8x16xf32>
    %25 = vector.broadcast %23 : vector<1x16xf32> to vector<8x16xf32>
    %26 = arith.addf %24, %25 : vector<8x16xf32>
    %c0_18 = arith.constant 0 : index
    %c1 = arith.constant 1 : index
    %c0_19 = arith.constant 0 : index
    %c0_20 = arith.constant 0 : index
    %27 = vector.load %arg4[%c0_18, %c1, %c0_19, %c0_20] : memref<1x4x8x16xf32, #tpu.memory_space<vmem>>, vector<1x1x8x16xf32>
    %28 = vector.shape_cast %27 : vector<1x1x8x16xf32> to vector<8x16xf32>
    %29 = arith.mulf %28, %26 : vector<8x16xf32>
    %30 = arith.addf %21, %29 : vector<8x16xf32>
    %31 = vector.extract_strided_slice %3 {offsets = [0, 2], sizes = [8, 1], strides = [1, 1]} : vector<8x8xf32> to vector<8x1xf32>
    %32 = vector.extract_strided_slice %7 {offsets = [2, 0], sizes = [1, 16], strides = [1, 1]} : vector<8x16xf32> to vector<1x16xf32>
    %33 = vector.broadcast %31 : vector<8x1xf32> to vector<8x16xf32>
    %34 = vector.broadcast %32 : vector<1x16xf32> to vector<8x16xf32>
    %35 = arith.addf %33, %34 : vector<8x16xf32>
    %c0_21 = arith.constant 0 : index
    %c2 = arith.constant 2 : index
    %c0_22 = arith.constant 0 : index
    %c0_23 = arith.constant 0 : index
    %36 = vector.load %arg4[%c0_21, %c2, %c0_22, %c0_23] : memref<1x4x8x16xf32, #tpu.memory_space<vmem>>, vector<1x1x8x16xf32>
    %37 = vector.shape_cast %36 : vector<1x1x8x16xf32> to vector<8x16xf32>
    %38 = arith.mulf %37, %35 : vector<8x16xf32>
    %39 = arith.addf %30, %38 : vector<8x16xf32>
    %40 = vector.extract_strided_slice %3 {offsets = [0, 3], sizes = [8, 1], strides = [1, 1]} : vector<8x8xf32> to vector<8x1xf32>
    %41 = vector.extract_strided_slice %7 {offsets = [3, 0], sizes = [1, 16], strides = [1, 1]} : vector<8x16xf32> to vector<1x16xf32>
    %42 = vector.broadcast %40 : vector<8x1xf32> to vector<8x16xf32>
    %43 = vector.broadcast %41 : vector<1x16xf32> to vector<8x16xf32>
    %44 = arith.addf %42, %43 : vector<8x16xf32>
    %c0_24 = arith.constant 0 : index
    %c3 = arith.constant 3 : index
    %c0_25 = arith.constant 0 : index
    %c0_26 = arith.constant 0 : index
    %45 = vector.load %arg4[%c0_24, %c3, %c0_25, %c0_26] : memref<1x4x8x16xf32, #tpu.memory_space<vmem>>, vector<1x1x8x16xf32>
    %46 = vector.shape_cast %45 : vector<1x1x8x16xf32> to vector<8x16xf32>
    %47 = arith.mulf %46, %44 : vector<8x16xf32>
    %48 = arith.addf %39, %47 : vector<8x16xf32>
    %cst_27 = arith.constant dense<0xFF800000> : vector<8xf32>
    %49 = vector.multi_reduction <maximumf>, %48, %cst_27 [1] : vector<8x16xf32> to vector<8xf32>
    %50 = vector.shape_cast %49 : vector<8xf32> to vector<8x1xf32>
    %51 = vector.broadcast %50 : vector<8x1xf32> to vector<8x16xf32>
    %52 = arith.subf %48, %51 : vector<8x16xf32>
    %53 = math.exp %52 : vector<8x16xf32>
    %cst_28 = arith.constant dense<0.000000e+00> : vector<8xf32>
    %54 = vector.multi_reduction <add>, %53, %cst_28 [1] : vector<8x16xf32> to vector<8xf32>
    %55 = vector.shape_cast %54 : vector<8xf32> to vector<8x1xf32>
    %56 = vector.extract_strided_slice %9 {offsets = [0, 0], sizes = [16, 8], strides = [1, 1]} : vector<16x16xf32> to vector<16x8xf32>
    %cst_29 = arith.constant dense<0.000000e+00> : vector<8x8xf32>
    %57 = tpu.matmul %53, %56, %cst_29 {dimension_numbers = #tpu.dot_dimension_numbers<[1], [0], [0], [1], [0, 0, 1, 1], [], []>} : vector<8x16xf32>, vector<16x8xf32>, vector<8x8xf32> -> vector<8x8xf32>
    %58 = tpu.reciprocal %55 {approx = true} : vector<8x1xf32> -> vector<8x1xf32>
    %59 = vector.broadcast %58 : vector<8x1xf32> to vector<8x8xf32>
    %60 = arith.mulf %57, %59 : vector<8x8xf32>
    %61 = vector.extract_strided_slice %1 {offsets = [0, 8], sizes = [8, 8], strides = [1, 1]} : vector<8x16xf32> to vector<8x8xf32>
    %62 = vector.extract_strided_slice %5 {offsets = [8, 0], sizes = [8, 16], strides = [1, 1]} : vector<16x16xf32> to vector<8x16xf32>
    %cst_30 = arith.constant dense<0.000000e+00> : vector<8x16xf32>
    %63 = tpu.matmul %61, %62, %cst_30 {dimension_numbers = #tpu.dot_dimension_numbers<[1], [0], [0], [1], [0, 0, 1, 1], [], []>} : vector<8x8xf32>, vector<8x16xf32>, vector<8x16xf32> -> vector<8x16xf32>
    %64 = vector.extract_strided_slice %3 {offsets = [0, 4], sizes = [8, 1], strides = [1, 1]} : vector<8x8xf32> to vector<8x1xf32>
    %65 = vector.extract_strided_slice %7 {offsets = [4, 0], sizes = [1, 16], strides = [1, 1]} : vector<8x16xf32> to vector<1x16xf32>
    %66 = vector.broadcast %64 : vector<8x1xf32> to vector<8x16xf32>
    %67 = vector.broadcast %65 : vector<1x16xf32> to vector<8x16xf32>
    %68 = arith.addf %66, %67 : vector<8x16xf32>
    %c0_31 = arith.constant 0 : index
    %c0_32 = arith.constant 0 : index
    %c0_33 = arith.constant 0 : index
    %c0_34 = arith.constant 0 : index
    %69 = vector.load %arg4[%c0_31, %c0_32, %c0_33, %c0_34] : memref<1x4x8x16xf32, #tpu.memory_space<vmem>>, vector<1x1x8x16xf32>
    %70 = vector.shape_cast %69 : vector<1x1x8x16xf32> to vector<8x16xf32>
    %71 = arith.mulf %70, %68 : vector<8x16xf32>
    %72 = arith.addf %63, %71 : vector<8x16xf32>
    %73 = vector.extract_strided_slice %3 {offsets = [0, 5], sizes = [8, 1], strides = [1, 1]} : vector<8x8xf32> to vector<8x1xf32>
    %74 = vector.extract_strided_slice %7 {offsets = [5, 0], sizes = [1, 16], strides = [1, 1]} : vector<8x16xf32> to vector<1x16xf32>
    %75 = vector.broadcast %73 : vector<8x1xf32> to vector<8x16xf32>
    %76 = vector.broadcast %74 : vector<1x16xf32> to vector<8x16xf32>
    %77 = arith.addf %75, %76 : vector<8x16xf32>
    %c0_35 = arith.constant 0 : index
    %c1_36 = arith.constant 1 : index
    %c0_37 = arith.constant 0 : index
    %c0_38 = arith.constant 0 : index
    %78 = vector.load %arg4[%c0_35, %c1_36, %c0_37, %c0_38] : memref<1x4x8x16xf32, #tpu.memory_space<vmem>>, vector<1x1x8x16xf32>
    %79 = vector.shape_cast %78 : vector<1x1x8x16xf32> to vector<8x16xf32>
    %80 = arith.mulf %79, %77 : vector<8x16xf32>
    %81 = arith.addf %72, %80 : vector<8x16xf32>
    %82 = vector.extract_strided_slice %3 {offsets = [0, 6], sizes = [8, 1], strides = [1, 1]} : vector<8x8xf32> to vector<8x1xf32>
    %83 = vector.extract_strided_slice %7 {offsets = [6, 0], sizes = [1, 16], strides = [1, 1]} : vector<8x16xf32> to vector<1x16xf32>
    %84 = vector.broadcast %82 : vector<8x1xf32> to vector<8x16xf32>
    %85 = vector.broadcast %83 : vector<1x16xf32> to vector<8x16xf32>
    %86 = arith.addf %84, %85 : vector<8x16xf32>
    %c0_39 = arith.constant 0 : index
    %c2_40 = arith.constant 2 : index
    %c0_41 = arith.constant 0 : index
    %c0_42 = arith.constant 0 : index
    %87 = vector.load %arg4[%c0_39, %c2_40, %c0_41, %c0_42] : memref<1x4x8x16xf32, #tpu.memory_space<vmem>>, vector<1x1x8x16xf32>
    %88 = vector.shape_cast %87 : vector<1x1x8x16xf32> to vector<8x16xf32>
    %89 = arith.mulf %88, %86 : vector<8x16xf32>
    %90 = arith.addf %81, %89 : vector<8x16xf32>
    %91 = vector.extract_strided_slice %3 {offsets = [0, 7], sizes = [8, 1], strides = [1, 1]} : vector<8x8xf32> to vector<8x1xf32>
    %92 = vector.extract_strided_slice %7 {offsets = [7, 0], sizes = [1, 16], strides = [1, 1]} : vector<8x16xf32> to vector<1x16xf32>
    %93 = vector.broadcast %91 : vector<8x1xf32> to vector<8x16xf32>
    %94 = vector.broadcast %92 : vector<1x16xf32> to vector<8x16xf32>
    %95 = arith.addf %93, %94 : vector<8x16xf32>
    %c0_43 = arith.constant 0 : index
    %c3_44 = arith.constant 3 : index
    %c0_45 = arith.constant 0 : index
    %c0_46 = arith.constant 0 : index
    %96 = vector.load %arg4[%c0_43, %c3_44, %c0_45, %c0_46] : memref<1x4x8x16xf32, #tpu.memory_space<vmem>>, vector<1x1x8x16xf32>
    %97 = vector.shape_cast %96 : vector<1x1x8x16xf32> to vector<8x16xf32>
    %98 = arith.mulf %97, %95 : vector<8x16xf32>
    %99 = arith.addf %90, %98 : vector<8x16xf32>
    %cst_47 = arith.constant dense<0xFF800000> : vector<8xf32>
    %100 = vector.multi_reduction <maximumf>, %99, %cst_47 [1] : vector<8x16xf32> to vector<8xf32>
    %101 = vector.shape_cast %100 : vector<8xf32> to vector<8x1xf32>
    %102 = vector.broadcast %101 : vector<8x1xf32> to vector<8x16xf32>
    %103 = arith.subf %99, %102 : vector<8x16xf32>
    %104 = math.exp %103 : vector<8x16xf32>
    %cst_48 = arith.constant dense<0.000000e+00> : vector<8xf32>
    %105 = vector.multi_reduction <add>, %104, %cst_48 [1] : vector<8x16xf32> to vector<8xf32>
    %106 = vector.shape_cast %105 : vector<8xf32> to vector<8x1xf32>
    %107 = vector.extract_strided_slice %9 {offsets = [0, 8], sizes = [16, 8], strides = [1, 1]} : vector<16x16xf32> to vector<16x8xf32>
    %cst_49 = arith.constant dense<0.000000e+00> : vector<8x8xf32>
    %108 = tpu.matmul %104, %107, %cst_49 {dimension_numbers = #tpu.dot_dimension_numbers<[1], [0], [0], [1], [0, 0, 1, 1], [], []>} : vector<8x16xf32>, vector<16x8xf32>, vector<8x8xf32> -> vector<8x8xf32>
    %109 = tpu.reciprocal %106 {approx = true} : vector<8x1xf32> -> vector<8x1xf32>
    %110 = vector.broadcast %109 : vector<8x1xf32> to vector<8x8xf32>
    %111 = arith.mulf %108, %110 : vector<8x8xf32>
    %112 = tpu.concatenate %60, %111 in 1 : vector<8x8xf32>, vector<8x8xf32> -> vector<8x16xf32>
    %c0_50 = arith.constant 0 : index
    %c0_51 = arith.constant 0 : index
    %113 = vector.load %arg8[%c0_50, %c0_51] : memref<16x128xf32, #tpu.memory_space<vmem>>, vector<16x128xf32>
    %cst_52 = arith.constant dense<0.000000e+00> : vector<8x128xf32>
    %114 = tpu.matmul %112, %113, %cst_52 {dimension_numbers = #tpu.dot_dimension_numbers<[1], [0], [0], [1], [0, 0, 1, 1], [], []>} : vector<8x16xf32>, vector<16x128xf32>, vector<8x128xf32> -> vector<8x128xf32>
    %c0_53 = arith.constant 0 : index
    %c0_54 = arith.constant 0 : index
    %115 = vector.load %arg9[%c0_53, %c0_54] : memref<1x128xf32, #tpu.memory_space<vmem>>, vector<1x128xf32>
    %116 = vector.broadcast %115 : vector<1x128xf32> to vector<8x128xf32>
    %117 = arith.addf %114, %116 : vector<8x128xf32>
    %c0_55 = arith.constant 0 : index
    %c0_56 = arith.constant 0 : index
    %c0_57 = arith.constant 0 : index
    %118 = vector.load %arg10[%c0_55, %c0_56, %c0_57] : memref<1x8x128xf32, #tpu.memory_space<vmem>>, vector<1x8x128xf32>
    %119 = vector.shape_cast %118 : vector<1x8x128xf32> to vector<8x128xf32>
    %120 = vector.shape_cast %117 : vector<8x128xf32> to vector<1x8x128xf32>
    tpu.vector_store %arg10[%c0_55, %c0_56, %c0_57], %120 {strides = array<i32>} : memref<1x8x128xf32, #tpu.memory_space<vmem>>, vector<1x8x128xf32>,
    return
  }
  func.func @transform_0(%arg0: i32, %arg1: i32) -> (i32, i32, i32) {
    %c0_i32 = arith.constant 0 : i32
    %c0_i32_0 = arith.constant 0 : i32
    return %arg0, %arg1, %c0_i32 : i32, i32, i32
  }
  func.func @transform_1(%arg0: i32, %arg1: i32) -> (i32, i32, i32) {
    %c0_i32 = arith.constant 0 : i32
    %c0_i32_0 = arith.constant 0 : i32
    return %arg0, %arg1, %c0_i32 : i32, i32, i32
  }
  func.func @transform_2(%arg0: i32, %arg1: i32) -> (i32, i32, i32, i32) {
    %c0_i32 = arith.constant 0 : i32
    %c0_i32_0 = arith.constant 0 : i32
    %c0_i32_1 = arith.constant 0 : i32
    return %arg0, %c0_i32, %arg1, %c0_i32_0 : i32, i32, i32, i32
  }
  func.func @transform_3(%arg0: i32, %arg1: i32) -> (i32, i32, i32) {
    %c0_i32 = arith.constant 0 : i32
    %c0_i32_0 = arith.constant 0 : i32
    %c0_i32_1 = arith.constant 0 : i32
    return %arg0, %c0_i32, %c0_i32_0 : i32, i32, i32
  }
  func.func @transform_4(%arg0: i32, %arg1: i32) -> (i32, i32, i32) {
    %c0_i32 = arith.constant 0 : i32
    %c0_i32_0 = arith.constant 0 : i32
    %c0_i32_1 = arith.constant 0 : i32
    return %arg0, %c0_i32, %c0_i32_0 : i32, i32, i32
  }
  func.func @transform_5(%arg0: i32, %arg1: i32) -> (i32, i32, i32) {
    %c0_i32 = arith.constant 0 : i32
    %c0_i32_0 = arith.constant 0 : i32
    %c0_i32_1 = arith.constant 0 : i32
    return %arg0, %c0_i32, %c0_i32_0 : i32, i32, i32
  }
  func.func @transform_6(%arg0: i32, %arg1: i32) -> (i32, i32) {
    %c0_i32 = arith.constant 0 : i32
    %c0_i32_0 = arith.constant 0 : i32
    %c0_i32_1 = arith.constant 0 : i32
    return %c0_i32, %c0_i32_0 : i32, i32
  }
  func.func @transform_7(%arg0: i32, %arg1: i32) -> (i32, i32) {
    %c0_i32 = arith.constant 0 : i32
    %c0_i32_0 = arith.constant 0 : i32
    %c0_i32_1 = arith.constant 0 : i32
    return %c0_i32, %c0_i32_0 : i32, i32
  }
  func.func @transform_8(%arg0: i32, %arg1: i32) -> (i32, i32, i32) {
    %c0_i32 = arith.constant 0 : i32
    %c0_i32_0 = arith.constant 0 : i32
    return %arg0, %arg1, %c0_i32 : i32, i32, i32
  }
}

</mosaic_0001>

<llo_original>
// kernel: tpu_custom_call.1
$region0: #{tpu_custom_call.1}
  #allocation0 [shape = 'u32[]', space=smem, size = 0x4, offset = 0x4, fixed_abs, tag = 'smem constant byte address 0x4 - core index']
  #allocation1 [shape = 'u32[144,128]{1,0:T(1,128)}', space=vmem, size = 0x12000, scoped, tag = 'internal scratch']
  %s0 = inlined_call_operand.hbm [shape: f32[2,8,16], index: 0, kind: input, shape index: {}]
  %s1 = inlined_call_operand.hbm [shape: f32[2,8,8], index: 1, kind: input, shape index: {}]
  %s2 = inlined_call_operand.hbm [shape: f32[2,4,8,16], index: 2, kind: input, shape index: {}]
  %s3 = inlined_call_operand.hbm [shape: f32[2,16,16], index: 3, kind: input, shape index: {}]
  %s4 = inlined_call_operand.hbm [shape: f32[2,8,16], index: 4, kind: input, shape index: {}]
  %s5 = inlined_call_operand.hbm [shape: f32[2,16,16], index: 5, kind: input, shape index: {}]
  %s6 = inlined_call_operand.hbm [shape: f32[16,128], index: 6, kind: input, shape index: {}]
  %s7 = inlined_call_operand.hbm [shape: f32[1,128], index: 7, kind: input, shape index: {}]
  %s8 = inlined_call_operand.hbm [shape: f32[2,8,128], index: 8, kind: output, shape index: {}]
  %s9 = sld [smem:[#allocation0]]
  $region97: #{tpu_custom_call.1} parent=0
    _
  %s11 = ssub.s32 1, %s9
  %s12 = scalar_select 0, %s11, %s9
  $region1: #{tpu_custom_call.1} parent=0
    #allocation2 [shape = 'u8[8192]{0}', space=vmem, size = 0x2000, scoped, tag = 'input window, operand 0']
    #allocation3 [shape = 's32[2]{0}', space=sflag, size = 0x8, scoped, tag = 'scoped memory for tpu_custom_call.1']
    #allocation4 [shape = 's32[2]{0}', space=sflag, size = 0x8, scoped, tag = 'scoped memory for tpu_custom_call.1']
    #allocation5 [shape = 'u8[8192]{0}', space=vmem, size = 0x2000, scoped, tag = 'input window, operand 1']
    #allocation6 [shape = 's32[2]{0}', space=sflag, size = 0x8, scoped, tag = 'scoped memory for tpu_custom_call.1']
    #allocation7 [shape = 'u8[32768]{0}', space=vmem, size = 0x8000, scoped, tag = 'input window, operand 2']
    #allocation8 [shape = 'u8[16384]{0}', space=vmem, size = 0x4000, scoped, tag = 'input window, operand 3']
    #allocation9 [shape = 's32[2]{0}', space=sflag, size = 0x8, scoped, tag = 'scoped memory for tpu_custom_call.1']
    #allocation10 [shape = 'u8[8192]{0}', space=vmem, size = 0x2000, scoped, tag = 'input window, operand 4']
    #allocation11 [shape = 'u8[16384]{0}', space=vmem, size = 0x4000, scoped, tag = 'input window, operand 5']
    #allocation12 [shape = 's32[2]{0}', space=sflag, size = 0x8, scoped, tag = 'scoped memory for tpu_custom_call.1']
    #allocation13 [shape = 'u8[8192]{0}', space=vmem, size = 0x2000, scoped, tag = 'input window, operand 6, single buffered']
    #allocation14 [shape = 'u8[512]{0}', space=vmem, size = 0x400, scoped, tag = 'input window, operand 7, single buffered']
    #allocation15 [shape = 's32[1]{0}', space=sflag, size = 0x4, scoped, tag = 'scoped memory for tpu_custom_call.1']
    #allocation16 [shape = 'u8[8192]{0}', space=vmem, size = 0x2000, scoped, tag = 'output window, operand 0']
    %13 = vsyncpa [#allocation3], 0
    %s14 = scalar_lea.sflag [#allocation3], 1
    %15 = vsyncpa %s14, 0
    %16 = vsyncpa [#allocation6], 0
    %s17 = scalar_lea.sflag [#allocation6], 1
    %18 = vsyncpa %s17, 0
    %19 = vsyncpa [#allocation9], 0
    %s20 = scalar_lea.sflag [#allocation9], 1
    %21 = vsyncpa %s20, 0
    %22 = vsyncpa [#allocation12], 0
    %s23 = scalar_lea.sflag [#allocation12], 1
    %24 = vsyncpa %s23, 0
    %25 = vsyncpa [#allocation15], 0
    %26 = vsyncpa [#allocation4], 0
    %s27 = scalar_lea.sflag [#allocation4], 1
    %28 = vsyncpa %s27, 0
    loop: start=0, step=1, limit=4
    $region2: #{tpu_custom_call.1} parent=1 // loop_pre_header
      _
    $region3: #{tpu_custom_call.1} parent=1 // loop_header
      %s30 = sphi 0, %s34
      %p31 = scmp.ge.s32.totalorder %s30, 4
      %s37 = sphi 0, %s49
      %s38 = sphi 0, %s45
      %s39 = sphi 0, %s37
      %s40 = sphi 0, %s38
      %s41 = sphi 0, %s39
      %s42 = sphi 0, %s40
      %s54 = sphi 0, %s56
      %s57 = sphi 0, %s54
      %s58 = sphi 0, %s57
      %s74 = sphi 0, %s58
      %s82 = sphi 0, %s84
      %s85 = sphi 0, %s82
      %s86 = sphi 0, %s85
      %s102 = sphi 0, %s86
      %s110 = sphi 0, %s112
      %s113 = sphi 0, %s110
      %s114 = sphi 0, %s113
      %s130 = sphi 0, %s114
      %s136 = sphi 0, %s138
      %s139 = sphi 0, %s136
      %s140 = sphi 0, %s139
      %s156 = sphi 0, %s140
      %s162 = sphi 0, %s164
      %s165 = sphi 0, %s162
      %s166 = sphi 0, %s165
      %s182 = sphi 0, %s166
      %s188 = sphi 0, %s190
      %s191 = sphi 0, %s188
      %s192 = sphi 0, %s191
      %s208 = sphi 0, %s192
      %s212 = sphi 0, %s212
      %s214 = sphi 0, %s212
      %s215 = sphi 0, %s214
      %s229 = sphi 0, %s215
      %s233 = sphi 0, %s233
      %s235 = sphi 0, %s233
      %s236 = sphi 0, %s235
      %s250 = sphi 0, %s236
      %s258 = sphi 0, %s260
      %s261 = sphi 0, %s258
      %s262 = sphi 0, %s261
      %s278 = sphi 0, %s262
    $region4: #{tpu_custom_call.1} parent=1 // loop_header_branch
      %33 = sbr.rel (%p31) target = $region8
    $region5: #{tpu_custom_call.1} parent=1 // loop_body
      %s35 = ssub.s32 %s30, 1
      %s36 = ssub.s32 %s30, 2
      %s43 = sadd.s32 1, %s38
      %p44 = scmp.ge.s32.totalorder %s43, 1
      %s45 = scalar_select %p44, 0, %s43
      %s46 = sadd.s32 1, %s37
      %s47 = scalar_select %p44, %s46, %s37
      %p48 = scmp.ge.s32.totalorder %s47, 2
      %s49 = scalar_select %p48, 0, %s47
      %s50 = ssub.s32 %s37, %s49
      %s51 = ssub.s32 %s38, %s45
      %s52 = sor.u32 %s50, %s51
      %p53 = scmp.eq.s32.totalorder %s52, 0
      %s55 = sadd.s32 %s54, 1
      %s56 = scalar_select %p53, %s54, %s55
      %p59 = pneg %p53
      %p60 = scmp.eq.s32.totalorder %s30, 1
      %p61 = por %p59, %p60
      %p62 = scmp.ne.s32.totalorder %s54, %s57
      %p63 = scmp.eq.s32.totalorder %s30, 0
      %p64 = por %p62, %p63
      %p65 = scmp.ne.s32.totalorder %s54, %s57
      %p66 = scmp.eq.s32.totalorder %s35, 1
      %p67 = por %p65, %p66
      %p68 = scmp.ne.s32.totalorder %s57, %s58
      %p69 = scmp.eq.s32.totalorder %s35, 0
      %p70 = por %p68, %p69
      %p71 = scmp.ne.s32.totalorder %s57, %s58
      %p72 = scmp.eq.s32.totalorder %s36, 1
      %p73 = por %p71, %p72
      %p75 = scmp.ne.s32.totalorder %s58, %s74
      %p76 = scmp.eq.s32.totalorder %s36, 0
      %p77 = por %p75, %p76
      %s78 = ssub.s32 %s37, %s49
      %s79 = ssub.s32 %s38, %s45
      %s80 = sor.u32 %s78, %s79
      %p81 = scmp.eq.s32.totalorder %s80, 0
      %s83 = sadd.s32 %s82, 1
      %s84 = scalar_select %p81, %s82, %s83
      %p87 = pneg %p81
      %p88 = scmp.eq.s32.totalorder %s30, 1
      %p89 = por %p87, %p88
      %p90 = scmp.ne.s32.totalorder %s82, %s85
      %p91 = scmp.eq.s32.totalorder %s30, 0
      %p92 = por %p90, %p91
      %p93 = scmp.ne.s32.totalorder %s82, %s85
      %p94 = scmp.eq.s32.totalorder %s35, 1
      %p95 = por %p93, %p94
      %p96 = scmp.ne.s32.totalorder %s85, %s86
      %p97 = scmp.eq.s32.totalorder %s35, 0
      %p98 = por %p96, %p97
      %p99 = scmp.ne.s32.totalorder %s85, %s86
      %p100 = scmp.eq.s32.totalorder %s36, 1
      %p101 = por %p99, %p100
      %p103 = scmp.ne.s32.totalorder %s86, %s102
      %p104 = scmp.eq.s32.totalorder %s36, 0
      %p105 = por %p103, %p104
      %s106 = ssub.s32 %s37, %s49
      %s107 = ssub.s32 %s38, %s45
      %s108 = sor.u32 %s106, %s107
      %p109 = scmp.eq.s32.totalorder %s108, 0
      %s111 = sadd.s32 %s110, 1
      %s112 = scalar_select %p109, %s110, %s111
      %p115 = pneg %p109
      %p116 = scmp.eq.s32.totalorder %s30, 1
      %p117 = por %p115, %p116
      %p118 = scmp.ne.s32.totalorder %s110, %s113
      %p119 = scmp.eq.s32.totalorder %s30, 0
      %p120 = por %p118, %p119
      %p121 = scmp.ne.s32.totalorder %s110, %s113
      %p122 = scmp.eq.s32.totalorder %s35, 1
      %p123 = por %p121, %p122
      %p124 = scmp.ne.s32.totalorder %s113, %s114
      %p125 = scmp.eq.s32.totalorder %s35, 0
      %p126 = por %p124, %p125
      %p127 = scmp.ne.s32.totalorder %s113, %s114
      %p128 = scmp.eq.s32.totalorder %s36, 1
      %p129 = por %p127, %p128
      %p131 = scmp.ne.s32.totalorder %s114, %s130
      %p132 = scmp.eq.s32.totalorder %s36, 0
      %p133 = por %p131, %p132
      %s134 = ssub.s32 %s37, %s49
      %p135 = scmp.eq.s32.totalorder %s134, 0
      %s137 = sadd.s32 %s136, 1
      %s138 = scalar_select %p135, %s136, %s137
      %p141 = pneg %p135
      %p142 = scmp.eq.s32.totalorder %s30, 1
      %p143 = por %p141, %p142
      %p144 = scmp.ne.s32.totalorder %s136, %s139
      %p145 = scmp.eq.s32.totalorder %s30, 0
      %p146 = por %p144, %p145
      %p147 = scmp.ne.s32.totalorder %s136, %s139
      %p148 = scmp.eq.s32.totalorder %s35, 1
      %p149 = por %p147, %p148
      %p150 = scmp.ne.s32.totalorder %s139, %s140
      %p151 = scmp.eq.s32.totalorder %s35, 0
      %p152 = por %p150, %p151
      %p153 = scmp.ne.s32.totalorder %s139, %s140
      %p154 = scmp.eq.s32.totalorder %s36, 1
      %p155 = por %p153, %p154
      %p157 = scmp.ne.s32.totalorder %s140, %s156
      %p158 = scmp.eq.s32.totalorder %s36, 0
      %p159 = por %p157, %p158
      %s160 = ssub.s32 %s37, %s49
      %p161 = scmp.eq.s32.totalorder %s160, 0
      %s163 = sadd.s32 %s162, 1
      %s164 = scalar_select %p161, %s162, %s163
      %p167 = pneg %p161
      %p168 = scmp.eq.s32.totalorder %s30, 1
      %p169 = por %p167, %p168
      %p170 = scmp.ne.s32.totalorder %s162, %s165
      %p171 = scmp.eq.s32.totalorder %s30, 0
      %p172 = por %p170, %p171
      %p173 = scmp.ne.s32.totalorder %s162, %s165
      %p174 = scmp.eq.s32.totalorder %s35, 1
      %p175 = por %p173, %p174
      %p176 = scmp.ne.s32.totalorder %s165, %s166
      %p177 = scmp.eq.s32.totalorder %s35, 0
      %p178 = por %p176, %p177
      %p179 = scmp.ne.s32.totalorder %s165, %s166
      %p180 = scmp.eq.s32.totalorder %s36, 1
      %p181 = por %p179, %p180
      %p183 = scmp.ne.s32.totalorder %s166, %s182
      %p184 = scmp.eq.s32.totalorder %s36, 0
      %p185 = por %p183, %p184
      %s186 = ssub.s32 %s37, %s49
      %p187 = scmp.eq.s32.totalorder %s186, 0
      %s189 = sadd.s32 %s188, 1
      %s190 = scalar_select %p187, %s188, %s189
      %p193 = pneg %p187
      %p194 = scmp.eq.s32.totalorder %s30, 1
      %p195 = por %p193, %p194
      %p196 = scmp.ne.s32.totalorder %s188, %s191
      %p197 = scmp.eq.s32.totalorder %s30, 0
      %p198 = por %p196, %p197
      %p199 = scmp.ne.s32.totalorder %s188, %s191
      %p200 = scmp.eq.s32.totalorder %s35, 1
      %p201 = por %p199, %p200
      %p202 = scmp.ne.s32.totalorder %s191, %s192
      %p203 = scmp.eq.s32.totalorder %s35, 0
      %p204 = por %p202, %p203
      %p205 = scmp.ne.s32.totalorder %s191, %s192
      %p206 = scmp.eq.s32.totalorder %s36, 1
      %p207 = por %p205, %p206
      %p209 = scmp.ne.s32.totalorder %s192, %s208
      %p210 = scmp.eq.s32.totalorder %s36, 0
      %p211 = por %p209, %p210
      %s213 = sadd.s32 %s212, 1
      %p216 = scmp.eq.s32.totalorder %s30, 1
      %p217 = scmp.ne.s32.totalorder %s212, %s214
      %p218 = scmp.eq.s32.totalorder %s30, 0
      %p219 = por %p217, %p218
      %p220 = scmp.ne.s32.totalorder %s212, %s214
      %p221 = scmp.eq.s32.totalorder %s35, 1
      %p222 = por %p220, %p221
      %p223 = scmp.ne.s32.totalorder %s214, %s215
      %p224 = scmp.eq.s32.totalorder %s35, 0
      %p225 = por %p223, %p224
      %p226 = scmp.ne.s32.totalorder %s214, %s215
      %p227 = scmp.eq.s32.totalorder %s36, 1
      %p228 = por %p226, %p227
      %p230 = scmp.ne.s32.totalorder %s215, %s229
      %p231 = scmp.eq.s32.totalorder %s36, 0
      %p232 = por %p230, %p231
      %s234 = sadd.s32 %s233, 1
      %p237 = scmp.eq.s32.totalorder %s30, 1
      %p238 = scmp.ne.s32.totalorder %s233, %s235
      %p239 = scmp.eq.s32.totalorder %s30, 0
      %p240 = por %p238, %p239
      %p241 = scmp.ne.s32.totalorder %s233, %s235
      %p242 = scmp.eq.s32.totalorder %s35, 1
      %p243 = por %p241, %p242
      %p244 = scmp.ne.s32.totalorder %s235, %s236
      %p245 = scmp.eq.s32.totalorder %s35, 0
      %p246 = por %p244, %p245
      %p247 = scmp.ne.s32.totalorder %s235, %s236
      %p248 = scmp.eq.s32.totalorder %s36, 1
      %p249 = por %p247, %p248
      %p251 = scmp.ne.s32.totalorder %s236, %s250
      %p252 = scmp.eq.s32.totalorder %s36, 0
      %p253 = por %p251, %p252
      %s254 = ssub.s32 %s37, %s49
      %s255 = ssub.s32 %s38, %s45
      %s256 = sor.u32 %s254, %s255
      %p257 = scmp.eq.s32.totalorder %s256, 0
      %s259 = sadd.s32 %s258, 1
      %s260 = scalar_select %p257, %s258, %s259
      %p263 = pneg %p257
      %p264 = scmp.eq.s32.totalorder %s30, 1
      %p265 = por %p263, %p264
      %p266 = scmp.ne.s32.totalorder %s258, %s261
      %p267 = scmp.eq.s32.totalorder %s30, 0
      %p268 = por %p266, %p267
      %p269 = scmp.ne.s32.totalorder %s258, %s261
      %p270 = scmp.eq.s32.totalorder %s35, 1
      %p271 = por %p269, %p270
      %p272 = scmp.ne.s32.totalorder %s261, %s262
      %p273 = scmp.eq.s32.totalorder %s35, 0
      %p274 = por %p272, %p273
      %p275 = scmp.ne.s32.totalorder %s261, %s262
      %p276 = scmp.eq.s32.totalorder %s36, 1
      %p277 = por %p275, %p276
      %p279 = scmp.ne.s32.totalorder %s262, %s278
      %p280 = scmp.eq.s32.totalorder %s36, 0
      %p281 = por %p279, %p280
      %p282 = scmp.le.s32.totalorder 1, %s30
      %p283 = scmp.lt.s32.totalorder %s30, 3
      %p284 = pnand %p282, %p283
      %p285 = pneg %p284
      // Predicated region
      $region9: #{tpu_custom_call.1} parent=5 // pred_check
        _
      $region10: #{tpu_custom_call.1} parent=5 // pred_check_branch
        %287 = sbr.rel (%p284) target = $region12
      $region11: #{tpu_custom_call.1} parent=5 // pred_region
        %s288 = ssub.s32 %s30, 1
        // Predicated region
        $region13: #{tpu_custom_call.1} parent=11 // pred_check
          %p289 = pneg %p225
        $region14: #{tpu_custom_call.1} parent=11 // pred_check_branch
          %291 = sbr.rel (%p289) target = $region16
        $region15: #{tpu_custom_call.1} parent=11 // pred_region
          %s293 = ssub.s32 256, 256
          %294 = vsyncadd [#allocation12], %s293
          %s295 = sshll.u32 [#allocation13], 4
          %s296 = int_to_ptr.vmem [resolvable:$true] %s295
          %301 = dma.hbm_to_vmem [thread:$0]  %s6, 256, %s296, [#allocation12], 128, 128, 8
        $region16: #{tpu_custom_call.1} parent=11 // pred_fallthru
          _
        // Predicated region
        $region17: #{tpu_custom_call.1} parent=11 // pred_check
          %p302 = pneg %p246
        $region18: #{tpu_custom_call.1} parent=11 // pred_check_branch
          %304 = sbr.rel (%p302) target = $region20
        $region19: #{tpu_custom_call.1} parent=11 // pred_region
          %s306 = ssub.s32 16, 16
          %307 = vsyncadd [#allocation15], %s306
          %s309 = sshll.u32 [#allocation14], 4
          %s310 = int_to_ptr.vmem [resolvable:$true] %s309
          %312 = dma.hbm_to_vmem [thread:$0]  %s7, 16, %s310, [#allocation15]
        $region20: #{tpu_custom_call.1} parent=11 // pred_fallthru
          _
      $region12: #{tpu_custom_call.1} parent=5 // pred_fallthru
        _
      %p313 = scmp.lt.s32.totalorder %s30, 2
      // Predicated region
      $region21: #{tpu_custom_call.1} parent=5 // pred_check
        %p314 = pneg %p313
      $region22: #{tpu_custom_call.1} parent=5 // pred_check_branch
        %316 = sbr.rel (%p314) target = $region24
      $region23: #{tpu_custom_call.1} parent=5 // pred_region
        // Predicated region
        $region25: #{tpu_custom_call.1} parent=23 // pred_check
          %p317 = pneg %p64
        $region26: #{tpu_custom_call.1} parent=23 // pred_check_branch
          %319 = sbr.rel (%p317) target = $region28
        $region27: #{tpu_custom_call.1} parent=23 // pred_region
          %s320 = sand.u32 %s54, 1
          %s321 = scalar_lea.sflag [#allocation3], %s320
          %s322 = sand.u32 %s54, 1
          %s323 = smul.addr %s322, 8
          %s324 = scalar_lea.vmem [#allocation2], %s323
          %s326 = ssub.s32 128, 128
          %327 = vsyncadd %s321, %s326
          %s328 = sadd.s32 %s38, %s37
          %s329 = smul.addr %s328, 128
          %s330 = scalar_lea.hbm %s0, %s329
          %s332 = sshll.u32 %s324, 4
          %s333 = int_to_ptr.vmem [resolvable:$true] %s332
          %335 = dma.hbm_to_vmem [thread:$0]  %s330, 128, %s333, %s321
        $region28: #{tpu_custom_call.1} parent=23 // pred_fallthru
          _
        // Predicated region
        $region29: #{tpu_custom_call.1} parent=23 // pred_check
          %p336 = pneg %p92
        $region30: #{tpu_custom_call.1} parent=23 // pred_check_branch
          %338 = sbr.rel (%p336) target = $region32
        $region31: #{tpu_custom_call.1} parent=23 // pred_region
          %s339 = sand.u32 %s30, 1
          %s340 = scalar_lea.sflag [#allocation6], %s339
          %s341 = sand.u32 %s82, 1
          %s342 = smul.addr %s341, 8
          %s343 = scalar_lea.vmem [#allocation5], %s342
          %s345 = ssub.s32 128, 128
          %346 = vsyncadd %s340, %s345
          %s347 = sadd.s32 %s38, %s37
          %s348 = smul.addr %s347, 128
          %s349 = scalar_lea.hbm %s1, %s348
          %s351 = sshll.u32 %s343, 4
          %s352 = int_to_ptr.vmem [resolvable:$true] %s351
          %354 = dma.hbm_to_vmem [thread:$0]  %s349, 128, %s352, %s340
        $region32: #{tpu_custom_call.1} parent=23 // pred_fallthru
          _
        // Predicated region
        $region33: #{tpu_custom_call.1} parent=23 // pred_check
          %p355 = pneg %p120
        $region34: #{tpu_custom_call.1} parent=23 // pred_check_branch
          %357 = sbr.rel (%p355) target = $region36
        $region35: #{tpu_custom_call.1} parent=23 // pred_region
          %s358 = sand.u32 %s30, 1
          %s359 = scalar_lea.sflag [#allocation6], %s358
          %s360 = sand.u32 %s110, 1
          %s361 = smul.addr %s360, 32
          %s362 = scalar_lea.vmem [#allocation7], %s361
          %s364 = ssub.s32 512, 512
          %365 = vsyncadd %s359, %s364
          %s366 = smul.addr %s37, 4
          %s367 = sadd.s32 %s38, %s366
          %s368 = smul.addr %s367, 128
          %s369 = scalar_lea.hbm %s2, %s368
          %s370 = sshll.u32 %s362, 4
          %s371 = int_to_ptr.vmem [resolvable:$true] %s370
          %376 = dma.hbm_to_vmem [thread:$0]  %s369, 512, %s371, %s359, 128, 128, 8
        $region36: #{tpu_custom_call.1} parent=23 // pred_fallthru
          _
        // Predicated region
        $region37: #{tpu_custom_call.1} parent=23 // pred_check
          %p377 = pneg %p146
        $region38: #{tpu_custom_call.1} parent=23 // pred_check_branch
          %379 = sbr.rel (%p377) target = $region40
        $region39: #{tpu_custom_call.1} parent=23 // pred_region
          %s380 = sand.u32 %s30, 1
          %s381 = scalar_lea.sflag [#allocation9], %s380
          %s382 = sand.u32 %s136, 1
          %s383 = smul.addr %s382, 16
          %s384 = scalar_lea.vmem [#allocation8], %s383
          %s386 = ssub.s32 256, 256
          %387 = vsyncadd %s381, %s386
          %s388 = smul.addr %s37, 2
          %s389 = smul.addr %s388, 128
          %s390 = scalar_lea.hbm %s3, %s389
          %s391 = sshll.u32 %s384, 4
          %s392 = int_to_ptr.vmem [resolvable:$true] %s391
          %397 = dma.hbm_to_vmem [thread:$0]  %s390, 256, %s392, %s381, 128, 128, 8
        $region40: #{tpu_custom_call.1} parent=23 // pred_fallthru
          _
        // Predicated region
        $region41: #{tpu_custom_call.1} parent=23 // pred_check
          %p398 = pneg %p172
        $region42: #{tpu_custom_call.1} parent=23 // pred_check_branch
          %400 = sbr.rel (%p398) target = $region44
        $region43: #{tpu_custom_call.1} parent=23 // pred_region
          %s401 = sand.u32 %s30, 1
          %s402 = scalar_lea.sflag [#allocation9], %s401
          %s403 = sand.u32 %s162, 1
          %s404 = smul.addr %s403, 8
          %s405 = scalar_lea.vmem [#allocation10], %s404
          %s407 = ssub.s32 128, 128
          %408 = vsyncadd %s402, %s407
          %s409 = smul.addr %s37, 128
          %s410 = scalar_lea.hbm %s4, %s409
          %s412 = sshll.u32 %s405, 4
          %s413 = int_to_ptr.vmem [resolvable:$true] %s412
          %415 = dma.hbm_to_vmem [thread:$0]  %s410, 128, %s413, %s402
        $region44: #{tpu_custom_call.1} parent=23 // pred_fallthru
          _
        // Predicated region
        $region45: #{tpu_custom_call.1} parent=23 // pred_check
          %p416 = pneg %p198
        $region46: #{tpu_custom_call.1} parent=23 // pred_check_branch
          %418 = sbr.rel (%p416) target = $region48
        $region47: #{tpu_custom_call.1} parent=23 // pred_region
          %s419 = sand.u32 %s30, 1
          %s420 = scalar_lea.sflag [#allocation12], %s419
          %s421 = sand.u32 %s188, 1
          %s422 = smul.addr %s421, 16
          %s423 = scalar_lea.vmem [#allocation11], %s422
          %s425 = ssub.s32 256, 256
          %426 = vsyncadd %s420, %s425
          %s427 = smul.addr %s37, 2
          %s428 = smul.addr %s427, 128
          %s429 = scalar_lea.hbm %s5, %s428
          %s430 = sshll.u32 %s423, 4
          %s431 = int_to_ptr.vmem [resolvable:$true] %s430
          %436 = dma.hbm_to_vmem [thread:$0]  %s429, 256, %s431, %s420, 128, 128, 8
        $region48: #{tpu_custom_call.1} parent=23 // pred_fallthru
          _
      $region24: #{tpu_custom_call.1} parent=5 // pred_fallthru
        _
      %p437 = scmp.le.s32.totalorder 1, %s30
      %p438 = scmp.lt.s32.totalorder %s30, 3
      %p439 = pnand %p437, %p438
      %p440 = pneg %p439
      // Predicated region
      $region49: #{tpu_custom_call.1} parent=5 // pred_check
        _
      $region50: #{tpu_custom_call.1} parent=5 // pred_check_branch
        %442 = sbr.rel (%p439) target = $region52
      $region51: #{tpu_custom_call.1} parent=5 // pred_region
        %s443 = ssub.s32 %s30, 1
        %s444 = sand.u32 %s57, 1
        %s445 = scalar_lea.sflag [#allocation3], %s444
        %s446 = sand.u32 %s57, 1
        %s447 = smul.addr %s446, 8
        %s448 = scalar_lea.vmem [#allocation2], %s447
        // Predicated region
        $region53: #{tpu_custom_call.1} parent=51 // pred_check
          %p449 = pneg %p70
        $region54: #{tpu_custom_call.1} parent=51 // pred_check_branch
          %451 = sbr.rel (%p449) target = $region56
        $region55: #{tpu_custom_call.1} parent=51 // pred_region
          %452 = dma.done %s445, 128
        $region56: #{tpu_custom_call.1} parent=51 // pred_fallthru
          _
        %s453 = sand.u32 %s35, 1
        %s454 = scalar_lea.sflag [#allocation6], %s453
        %s455 = sand.u32 %s85, 1
        %s456 = smul.addr %s455, 8
        %s457 = scalar_lea.vmem [#allocation5], %s456
        // Predicated region
        $region57: #{tpu_custom_call.1} parent=51 // pred_check
          %p458 = pneg %p98
        $region58: #{tpu_custom_call.1} parent=51 // pred_check_branch
          %460 = sbr.rel (%p458) target = $region60
        $region59: #{tpu_custom_call.1} parent=51 // pred_region
          %461 = dma.done %s454, 128
        $region60: #{tpu_custom_call.1} parent=51 // pred_fallthru
          _
        %s462 = sand.u32 %s35, 1
        %s463 = scalar_lea.sflag [#allocation6], %s462
        %s464 = sand.u32 %s113, 1
        %s465 = smul.addr %s464, 32
        %s466 = scalar_lea.vmem [#allocation7], %s465
        // Predicated region
        $region61: #{tpu_custom_call.1} parent=51 // pred_check
          %p467 = pneg %p126
        $region62: #{tpu_custom_call.1} parent=51 // pred_check_branch
          %469 = sbr.rel (%p467) target = $region64
        $region63: #{tpu_custom_call.1} parent=51 // pred_region
          %470 = dma.done %s463, 512
        $region64: #{tpu_custom_call.1} parent=51 // pred_fallthru
          _
        %s471 = sand.u32 %s35, 1
        %s472 = scalar_lea.sflag [#allocation9], %s471
        %s473 = sand.u32 %s139, 1
        %s474 = smul.addr %s473, 16
        %s475 = scalar_lea.vmem [#allocation8], %s474
        // Predicated region
        $region65: #{tpu_custom_call.1} parent=51 // pred_check
          %p476 = pneg %p152
        $region66: #{tpu_custom_call.1} parent=51 // pred_check_branch
          %478 = sbr.rel (%p476) target = $region68
        $region67: #{tpu_custom_call.1} parent=51 // pred_region
          %479 = dma.done %s472, 256
        $region68: #{tpu_custom_call.1} parent=51 // pred_fallthru
          _
        %s480 = sand.u32 %s35, 1
        %s481 = scalar_lea.sflag [#allocation9], %s480
        %s482 = sand.u32 %s165, 1
        %s483 = smul.addr %s482, 8
        %s484 = scalar_lea.vmem [#allocation10], %s483
        // Predicated region
        $region69: #{tpu_custom_call.1} parent=51 // pred_check
          %p485 = pneg %p178
        $region70: #{tpu_custom_call.1} parent=51 // pred_check_branch
          %487 = sbr.rel (%p485) target = $region72
        $region71: #{tpu_custom_call.1} parent=51 // pred_region
          %488 = dma.done %s481, 128
        $region72: #{tpu_custom_call.1} parent=51 // pred_fallthru
          _
        %s489 = sand.u32 %s35, 1
        %s490 = scalar_lea.sflag [#allocation12], %s489
        %s491 = sand.u32 %s191, 1
        %s492 = smul.addr %s491, 16
        %s493 = scalar_lea.vmem [#allocation11], %s492
        // Predicated region
        $region73: #{tpu_custom_call.1} parent=51 // pred_check
          %p494 = pneg %p204
        $region74: #{tpu_custom_call.1} parent=51 // pred_check_branch
          %496 = sbr.rel (%p494) target = $region76
        $region75: #{tpu_custom_call.1} parent=51 // pred_region
          %497 = dma.done %s490, 256
        $region76: #{tpu_custom_call.1} parent=51 // pred_fallthru
          _
        // Predicated region
        $region77: #{tpu_custom_call.1} parent=51 // pred_check
          %p498 = pneg %p225
        $region78: #{tpu_custom_call.1} parent=51 // pred_check_branch
          %500 = sbr.rel (%p498) target = $region80
        $region79: #{tpu_custom_call.1} parent=51 // pred_region
          %501 = dma.done [#allocation12], 256
        $region80: #{tpu_custom_call.1} parent=51 // pred_fallthru
          _
        // Predicated region
        $region81: #{tpu_custom_call.1} parent=51 // pred_check
          %p502 = pneg %p246
        $region82: #{tpu_custom_call.1} parent=51 // pred_check_branch
          %504 = sbr.rel (%p502) target = $region84
        $region83: #{tpu_custom_call.1} parent=51 // pred_region
          %505 = dma.done [#allocation15], 16
        $region84: #{tpu_custom_call.1} parent=51 // pred_fallthru
          _
        %s506 = sand.u32 %s57, 1
        %s507 = scalar_lea.sflag [#allocation3], %s506
        %s508 = sand.u32 %s57, 1
        %s509 = smul.addr %s508, 8
        %s510 = scalar_lea.vmem [#allocation2], %s509
        %p511 = pneg %p70
        %p512 = pneg %p67
        %s513 = sand.u32 %s35, 1
        %s514 = scalar_lea.sflag [#allocation6], %s513
        %s515 = sand.u32 %s85, 1
        %s516 = smul.addr %s515, 8
        %s517 = scalar_lea.vmem [#allocation5], %s516
        %p518 = pneg %p98
        %p519 = pneg %p95
        %s520 = sand.u32 %s35, 1
        %s521 = scalar_lea.sflag [#allocation6], %s520
        %s522 = sand.u32 %s113, 1
        %s523 = smul.addr %s522, 32
        %s524 = scalar_lea.vmem [#allocation7], %s523
        %p525 = pneg %p126
        %p526 = pneg %p123
        %s527 = sand.u32 %s35, 1
        %s528 = scalar_lea.sflag [#allocation9], %s527
        %s529 = sand.u32 %s139, 1
        %s530 = smul.addr %s529, 16
        %s531 = scalar_lea.vmem [#allocation8], %s530
        %p532 = pneg %p152
        %p533 = pneg %p149
        %s534 = sand.u32 %s35, 1
        %s535 = scalar_lea.sflag [#allocation9], %s534
        %s536 = sand.u32 %s165, 1
        %s537 = smul.addr %s536, 8
        %s538 = scalar_lea.vmem [#allocation10], %s537
        %p539 = pneg %p178
        %p540 = pneg %p175
        %s541 = sand.u32 %s35, 1
        %s542 = scalar_lea.sflag [#allocation12], %s541
        %s543 = sand.u32 %s191, 1
        %s544 = smul.addr %s543, 16
        %s545 = scalar_lea.vmem [#allocation11], %s544
        %p546 = pneg %p204
        %p547 = pneg %p201
        %p548 = pneg %p225
        %p549 = pneg %p222
        %p550 = pneg %p246
        %p551 = pneg %p243
        %p552 = pneg %p274
        %p553 = pneg %p271
        %s554 = sand.u32 %s261, 1
        %s555 = scalar_lea.sflag [#allocation4], %s554
        %s556 = sand.u32 %s261, 1
        %s557 = smul.addr %s556, 8
        %s558 = scalar_lea.vmem [#allocation16], %s557
        %v559 = vld [vmem:[%s448] sm:$0xff]
        %v560 = vld [vmem:[%s457] sm:$0xff]
        %v561 = vld [vmem:[%s475] sm:$0xff]
        %v562 = vld [vmem:[%s475 + $0x8] sm:$0xff]
        %v563 = vld [vmem:[%s484] sm:$0xff]
        %v564 = vld [vmem:[%s493] sm:$0xff]
        %v565 = vld [vmem:[%s493 + $0x8] sm:$0xff]
        %567 = vset.pattern.permute.xlu0 0
        %568 = vperm.xlu0 %567, %v560
        %v569 = vpop.permute.xlu0 %568
        %v571 = vlaneseq
        %v572 = vshrl.u32 %v571, 7
        %v573 = vsub.s32 0, %v572
        %v574 = vrot.slane %v563, %v573
        %v575 = vadd.f32 %v569, %v574
        %v576 = vld [vmem:[%s466] sm:$0xff]
        %v577 = vmul.f32 %v576, %v575
        %vm578 = vcmask 64512
        %v580 = vsel %vm578, %v559, 0
        %582 = vmatprep.subr.mxu0 0.0
        %583 = vmatpush1.msra.mxu0 %v561
        %584 = vmatprep.subr.mxu0 0.0
        %585 = vmatpush1.msra.mxu0 0.0
        %586 = vmatprep.subr.mxu0 0.0
        %587 = vmatpush1.msra.mxu0 0.0
        %588 = vmatprep.subr.mxu0 0.0
        %589 = vmatpush1.msra.mxu0 0.0
        %590 = vmatprep.subr.mxu0 0.0
        %591 = vmatpush1.msra.mxu0 0.0
        %592 = vmatprep.subr.mxu0 0.0
        %593 = vmatpush1.msra.mxu0 0.0
        %594 = vmatprep.subr.mxu0 0.0
        %595 = vmatpush1.msra.mxu0 0.0
        %596 = vmatprep.subr.mxu0 0.0
        %597 = vmatpush1.msra.mxu0 0.0
        %598 = vmatprep.subr.mxu0 0.0
        %599 = vmatpush1.msra.mxu0 0.0
        %600 = vmatprep.subr.mxu0 0.0
        %601 = vmatpush1.msra.mxu0 0.0
        %602 = vmatprep.subr.mxu0 0.0
        %603 = vmatpush1.msra.mxu0 0.0
        %604 = vmatprep.subr.mxu0 0.0
        %605 = vmatpush1.msra.mxu0 0.0
        %606 = vmatprep.subr.mxu0 0.0
        %607 = vmatpush1.msra.mxu0 0.0
        %608 = vmatprep.subr.mxu0 0.0
        %609 = vmatpush1.msra.mxu0 0.0
        %610 = vmatprep.subr.mxu0 0.0
        %611 = vmatpush1.msra.mxu0 0.0
        %612 = vmatprep.subr.mxu0 0.0
        %613 = vmatpush1.msra.mxu0 0.0
        %614 = vmatprep.subr.mxu0 0.0
        %615 = vmatpush1.msra.mxu0 0.0
        %616 = vmatprep.subr.mxu0 0.0
        %617 = vmatpush1.msra.mxu0 0.0
        %618 = vmatprep.subr.mxu0 0.0
        %619 = vmatpush1.msra.mxu0 0.0
        %620 = vmatprep.subr.mxu0 0.0
        %621 = vmatpush1.msra.mxu0 0.0
        %622 = vmatprep.subr.mxu0 0.0
        %623 = vmatpush1.msra.mxu0 0.0
        %624 = vmatprep.subr.mxu0 0.0
        %625 = vmatpush1.msra.mxu0 0.0
        %626 = vmatprep.subr.mxu0 0.0
        %627 = vmatpush1.msra.mxu0 0.0
        %628 = vmatprep.subr.mxu0 0.0
        %629 = vmatpush1.msra.mxu0 0.0
        %630 = vmatprep.subr.mxu0 0.0
        %631 = vmatpush1.msra.mxu0 0.0
        %632 = vmatprep.subr.mxu0 0.0
        %633 = vmatpush1.msra.mxu0 0.0
        %634 = vmatprep.subr.mxu0 0.0
        %635 = vmatpush1.msra.mxu0 0.0
        %636 = vmatprep.subr.mxu0 0.0
        %637 = vmatpush1.msra.mxu0 0.0
        %638 = vmatprep.subr.mxu0 0.0
        %639 = vmatpush1.msra.mxu0 0.0
        %640 = vmatprep.subr.mxu0 0.0
        %641 = vmatpush1.msra.mxu0 0.0
        %642 = vmatprep.subr.mxu0 0.0
        %643 = vmatpush1.msra.mxu0 0.0
        %644 = vmatprep.subr.mxu0 0.0
        %645 = vmatpush1.msra.mxu0 0.0
        %646 = vmatprep.mubr.f32.mxu0 0.0
        %647 = vmatmul.mubr.f32.gmra.mrb[0].mxu0 %v580
        %v648 = vpop.f32.mrb[0].mxu0
        %v649 = vadd.f32 %v577, %v648
        %v650 = vpop.f32.mrb[0].mxu0
        %651 = vdwg.mxu0
        %652 = vset.pattern.permute.xlu0 1
        %653 = vperm.xlu0 %652, %v560
        %v654 = vpop.permute.xlu0 %653
        %v656 = vlaneseq
        %v657 = vshrl.u32 %v656, 7
        %v658 = vsub.s32 1, %v657
        %v659 = vrot.slane %v563, %v658
        %v660 = vadd.f32 %v654, %v659
        %s661 = scalar_lea.vmem %s466, 8 [#allocation7]
        %v662 = vld [vmem:[%s661] sm:$0xff]
        %v663 = vmul.f32 %v662, %v660
        %v664 = vadd.f32 %v649, %v663
        %665 = vset.pattern.permute.xlu0 2
        %666 = vperm.xlu0 %665, %v560
        %v667 = vpop.permute.xlu0 %666
        %v669 = vlaneseq
        %v670 = vshrl.u32 %v669, 7
        %v671 = vsub.s32 2, %v670
        %v672 = vrot.slane %v563, %v671
        %v673 = vadd.f32 %v667, %v672
        %s674 = scalar_lea.vmem %s466, 16 [#allocation7]
        %v675 = vld [vmem:[%s674] sm:$0xff]
        %v676 = vmul.f32 %v675, %v673
        %v677 = vadd.f32 %v664, %v676
        %678 = vset.pattern.permute.xlu0 3
        %679 = vperm.xlu0 %678, %v560
        %v680 = vpop.permute.xlu0 %679
        %v682 = vlaneseq
        %v683 = vshrl.u32 %v682, 7
        %v684 = vsub.s32 3, %v683
        %v685 = vrot.slane %v563, %v684
        %v686 = vadd.f32 %v680, %v685
        %s687 = scalar_lea.vmem %s466, 24 [#allocation7]
        %v688 = vld [vmem:[%s687] sm:$0xff]
        %v689 = vmul.f32 %v688, %v686
        %v690 = vadd.f32 %v677, %v689
        %vm691 = vcmask 130048
        %v692 = vsel %vm691, %v690, -inf
        %693 = vmax.xlane.f32.xlu0 %v692
        %v694 = vpop.xlane.xlu0 %693
        %v695 = vsub.f32 %v690, %v694
        %v696 = vmul.f32 %v695, 1.442695
        %v697 = vpow.pop %v696
        %v698 = vsel %vm691, %v697, 0.0
        %699 = vadd.xlane.f32.xlu0 %v698
        %v700 = vpop.xlane.xlu0 %699
        %v702 = vsel %vm691, %v697, 0
        %704 = vmatprep.subr.mxu0 0.0
        %705 = vmatpush1.msra.mxu0 %v564
        %706 = vmatprep.subr.mxu0 0.0
        %707 = vmatpush1.msra.mxu0 %v565
        %708 = vmatprep.subr.mxu0 0.0
        %709 = vmatpush1.msra.mxu0 0.0
        %710 = vmatprep.subr.mxu0 0.0
        %711 = vmatpush1.msra.mxu0 0.0
        %712 = vmatprep.subr.mxu0 0.0
        %713 = vmatpush1.msra.mxu0 0.0
        %714 = vmatprep.subr.mxu0 0.0
        %715 = vmatpush1.msra.mxu0 0.0
        %716 = vmatprep.subr.mxu0 0.0
        %717 = vmatpush1.msra.mxu0 0.0
        %718 = vmatprep.subr.mxu0 0.0
        %719 = vmatpush1.msra.mxu0 0.0
        %720 = vmatprep.subr.mxu0 0.0
        %721 = vmatpush1.msra.mxu0 0.0
        %722 = vmatprep.subr.mxu0 0.0
        %723 = vmatpush1.msra.mxu0 0.0
        %724 = vmatprep.subr.mxu0 0.0
        %725 = vmatpush1.msra.mxu0 0.0
        %726 = vmatprep.subr.mxu0 0.0
        %727 = vmatpush1.msra.mxu0 0.0
        %728 = vmatprep.subr.mxu0 0.0
        %729 = vmatpush1.msra.mxu0 0.0
        %730 = vmatprep.subr.mxu0 0.0
        %731 = vmatpush1.msra.mxu0 0.0
        %732 = vmatprep.subr.mxu0 0.0
        %733 = vmatpush1.msra.mxu0 0.0
        %734 = vmatprep.subr.mxu0 0.0
        %735 = vmatpush1.msra.mxu0 0.0
        %736 = vmatprep.subr.mxu0 0.0
        %737 = vmatpush1.msra.mxu0 0.0
        %738 = vmatprep.subr.mxu0 0.0
        %739 = vmatpush1.msra.mxu0 0.0
        %740 = vmatprep.subr.mxu0 0.0
        %741 = vmatpush1.msra.mxu0 0.0
        %742 = vmatprep.subr.mxu0 0.0
        %743 = vmatpush1.msra.mxu0 0.0
        %744 = vmatprep.subr.mxu0 0.0
        %745 = vmatpush1.msra.mxu0 0.0
        %746 = vmatprep.subr.mxu0 0.0
        %747 = vmatpush1.msra.mxu0 0.0
        %748 = vmatprep.subr.mxu0 0.0
        %749 = vmatpush1.msra.mxu0 0.0
        %750 = vmatprep.subr.mxu0 0.0
        %751 = vmatpush1.msra.mxu0 0.0
        %752 = vmatprep.subr.mxu0 0.0
        %753 = vmatpush1.msra.mxu0 0.0
        %754 = vmatprep.subr.mxu0 0.0
        %755 = vmatpush1.msra.mxu0 0.0
        %756 = vmatprep.subr.mxu0 0.0
        %757 = vmatpush1.msra.mxu0 0.0
        %758 = vmatprep.subr.mxu0 0.0
        %759 = vmatpush1.msra.mxu0 0.0
        %760 = vmatprep.subr.mxu0 0.0
        %761 = vmatpush1.msra.mxu0 0.0
        %762 = vmatprep.subr.mxu0 0.0
        %763 = vmatpush1.msra.mxu0 0.0
        %764 = vmatprep.subr.mxu0 0.0
        %765 = vmatpush1.msra.mxu0 0.0
        %766 = vmatprep.subr.mxu0 0.0
        %767 = vmatpush1.msra.mxu0 0.0
        %768 = vmatprep.mubr.f32.mxu0 0.0
        %769 = vmatmul.mubr.f32.gmra.mrb[0].mxu0 %v702
        %v770 = vpop.f32.mrb[0].mxu0
        %v771 = vadd.f32 0.0, %v770
        %v772 = vpop.f32.mrb[0].mxu0
        %773 = vdwg.mxu0
        %v774 = vrcp.pop %v700
        %v775 = vmul.f32 %v771, %v774
        %776 = vset.pattern.permute.xlu0 4
        %777 = vperm.xlu0 %776, %v560
        %v778 = vpop.permute.xlu0 %777
        %v780 = vlaneseq
        %v781 = vshrl.u32 %v780, 7
        %v782 = vsub.s32 4, %v781
        %v783 = vrot.slane %v563, %v782
        %v784 = vadd.f32 %v778, %v783
        %v785 = vmul.f32 %v576, %v784
        %786 = vrot.lane.b32.xlu0 %v559, 120
        %v787 = vpop.permute.xlu0 %786
        %v788 = vsel %vm578, %v787, 0
        %790 = vmatprep.subr.mxu0 0.0
        %791 = vmatpush1.msra.mxu0 %v562
        %792 = vmatprep.subr.mxu0 0.0
        %793 = vmatpush1.msra.mxu0 0.0
        %794 = vmatprep.subr.mxu0 0.0
        %795 = vmatpush1.msra.mxu0 0.0
        %796 = vmatprep.subr.mxu0 0.0
        %797 = vmatpush1.msra.mxu0 0.0
        %798 = vmatprep.subr.mxu0 0.0
        %799 = vmatpush1.msra.mxu0 0.0
        %800 = vmatprep.subr.mxu0 0.0
        %801 = vmatpush1.msra.mxu0 0.0
        %802 = vmatprep.subr.mxu0 0.0
        %803 = vmatpush1.msra.mxu0 0.0
        %804 = vmatprep.subr.mxu0 0.0
        %805 = vmatpush1.msra.mxu0 0.0
        %806 = vmatprep.subr.mxu0 0.0
        %807 = vmatpush1.msra.mxu0 0.0
        %808 = vmatprep.subr.mxu0 0.0
        %809 = vmatpush1.msra.mxu0 0.0
        %810 = vmatprep.subr.mxu0 0.0
        %811 = vmatpush1.msra.mxu0 0.0
        %812 = vmatprep.subr.mxu0 0.0
        %813 = vmatpush1.msra.mxu0 0.0
        %814 = vmatprep.subr.mxu0 0.0
        %815 = vmatpush1.msra.mxu0 0.0
        %816 = vmatprep.subr.mxu0 0.0
        %817 = vmatpush1.msra.mxu0 0.0
        %818 = vmatprep.subr.mxu0 0.0
        %819 = vmatpush1.msra.mxu0 0.0
        %820 = vmatprep.subr.mxu0 0.0
        %821 = vmatpush1.msra.mxu0 0.0
        %822 = vmatprep.subr.mxu0 0.0
        %823 = vmatpush1.msra.mxu0 0.0
        %824 = vmatprep.subr.mxu0 0.0
        %825 = vmatpush1.msra.mxu0 0.0
        %826 = vmatprep.subr.mxu0 0.0
        %827 = vmatpush1.msra.mxu0 0.0
        %828 = vmatprep.subr.mxu0 0.0
        %829 = vmatpush1.msra.mxu0 0.0
        %830 = vmatprep.subr.mxu0 0.0
        %831 = vmatpush1.msra.mxu0 0.0
        %832 = vmatprep.subr.mxu0 0.0
        %833 = vmatpush1.msra.mxu0 0.0
        %834 = vmatprep.subr.mxu0 0.0
        %835 = vmatpush1.msra.mxu0 0.0
        %836 = vmatprep.subr.mxu0 0.0
        %837 = vmatpush1.msra.mxu0 0.0
        %838 = vmatprep.subr.mxu0 0.0
        %839 = vmatpush1.msra.mxu0 0.0
        %840 = vmatprep.subr.mxu0 0.0
        %841 = vmatpush1.msra.mxu0 0.0
        %842 = vmatprep.subr.mxu0 0.0
        %843 = vmatpush1.msra.mxu0 0.0
        %844 = vmatprep.subr.mxu0 0.0
        %845 = vmatpush1.msra.mxu0 0.0
        %846 = vmatprep.subr.mxu0 0.0
        %847 = vmatpush1.msra.mxu0 0.0
        %848 = vmatprep.subr.mxu0 0.0
        %849 = vmatpush1.msra.mxu0 0.0
        %850 = vmatprep.subr.mxu0 0.0
        %851 = vmatpush1.msra.mxu0 0.0
        %852 = vmatprep.subr.mxu0 0.0
        %853 = vmatpush1.msra.mxu0 0.0
        %854 = vmatprep.mubr.f32.mxu0 0.0
        %855 = vmatmul.mubr.f32.gmra.mrb[0].mxu0 %v788
        %v856 = vpop.f32.mrb[0].mxu0
        %v857 = vadd.f32 %v785, %v856
        %v858 = vpop.f32.mrb[0].mxu0
        %859 = vdwg.mxu0
        %860 = vset.pattern.permute.xlu0 5
        %861 = vperm.xlu0 %860, %v560
        %v862 = vpop.permute.xlu0 %861
        %v864 = vlaneseq
        %v865 = vshrl.u32 %v864, 7
        %v866 = vsub.s32 5, %v865
        %v867 = vrot.slane %v563, %v866
        %v868 = vadd.f32 %v862, %v867
        %v869 = vmul.f32 %v662, %v868
        %v870 = vadd.f32 %v857, %v869
        %871 = vset.pattern.permute.xlu0 6
        %872 = vperm.xlu0 %871, %v560
        %v873 = vpop.permute.xlu0 %872
        %v875 = vlaneseq
        %v876 = vshrl.u32 %v875, 7
        %v877 = vsub.s32 6, %v876
        %v878 = vrot.slane %v563, %v877
        %v879 = vadd.f32 %v873, %v878
        %v880 = vmul.f32 %v675, %v879
        %v881 = vadd.f32 %v870, %v880
        %882 = vset.pattern.permute.xlu0 7
        %883 = vperm.xlu0 %882, %v560
        %v884 = vpop.permute.xlu0 %883
        %v886 = vlaneseq
        %v887 = vshrl.u32 %v886, 7
        %v888 = vsub.s32 7, %v887
        %v889 = vrot.slane %v563, %v888
        %v890 = vadd.f32 %v884, %v889
        %v891 = vmul.f32 %v688, %v890
        %v892 = vadd.f32 %v881, %v891
        %v893 = vsel %vm691, %v892, -inf
        %894 = vmax.xlane.f32.xlu0 %v893
        %v895 = vpop.xlane.xlu0 %894
        %v896 = vsub.f32 %v892, %v895
        %v897 = vmul.f32 %v896, 1.442695
        %v898 = vpow.pop %v897
        %v899 = vsel %vm691, %v898, 0.0
        %900 = vadd.xlane.f32.xlu0 %v899
        %v901 = vpop.xlane.xlu0 %900
        %904 = vrot.lane.b32.xlu0 %v564, 120
        %v905 = vpop.permute.xlu0 %904
        %906 = vrot.lane.b32.xlu0 %v565, 120
        %v907 = vpop.permute.xlu0 %906
        %v911 = vsel %vm691, %v898, 0
        %913 = vmatprep.subr.mxu0 0.0
        %914 = vmatpush1.msra.mxu0 %v905
        %915 = vmatprep.subr.mxu0 0.0
        %916 = vmatpush1.msra.mxu0 %v907
        %917 = vmatprep.subr.mxu0 0.0
        %918 = vmatpush1.msra.mxu0 0.0
        %919 = vmatprep.subr.mxu0 0.0
        %920 = vmatpush1.msra.mxu0 0.0
        %921 = vmatprep.subr.mxu0 0.0
        %922 = vmatpush1.msra.mxu0 0.0
        %923 = vmatprep.subr.mxu0 0.0
        %924 = vmatpush1.msra.mxu0 0.0
        %925 = vmatprep.subr.mxu0 0.0
        %926 = vmatpush1.msra.mxu0 0.0
        %927 = vmatprep.subr.mxu0 0.0
        %928 = vmatpush1.msra.mxu0 0.0
        %929 = vmatprep.subr.mxu0 0.0
        %930 = vmatpush1.msra.mxu0 0.0
        %931 = vmatprep.subr.mxu0 0.0
        %932 = vmatpush1.msra.mxu0 0.0
        %933 = vmatprep.subr.mxu0 0.0
        %934 = vmatpush1.msra.mxu0 0.0
        %935 = vmatprep.subr.mxu0 0.0
        %936 = vmatpush1.msra.mxu0 0.0
        %937 = vmatprep.subr.mxu0 0.0
        %938 = vmatpush1.msra.mxu0 0.0
        %939 = vmatprep.subr.mxu0 0.0
        %940 = vmatpush1.msra.mxu0 0.0
        %941 = vmatprep.subr.mxu0 0.0
        %942 = vmatpush1.msra.mxu0 0.0
        %943 = vmatprep.subr.mxu0 0.0
        %944 = vmatpush1.msra.mxu0 0.0
        %945 = vmatprep.subr.mxu0 0.0
        %946 = vmatpush1.msra.mxu0 0.0
        %947 = vmatprep.subr.mxu0 0.0
        %948 = vmatpush1.msra.mxu0 0.0
        %949 = vmatprep.subr.mxu0 0.0
        %950 = vmatpush1.msra.mxu0 0.0
        %951 = vmatprep.subr.mxu0 0.0
        %952 = vmatpush1.msra.mxu0 0.0
        %953 = vmatprep.subr.mxu0 0.0
        %954 = vmatpush1.msra.mxu0 0.0
        %955 = vmatprep.subr.mxu0 0.0
        %956 = vmatpush1.msra.mxu0 0.0
        %957 = vmatprep.subr.mxu0 0.0
        %958 = vmatpush1.msra.mxu0 0.0
        %959 = vmatprep.subr.mxu0 0.0
        %960 = vmatpush1.msra.mxu0 0.0
        %961 = vmatprep.subr.mxu0 0.0
        %962 = vmatpush1.msra.mxu0 0.0
        %963 = vmatprep.subr.mxu0 0.0
        %964 = vmatpush1.msra.mxu0 0.0
        %965 = vmatprep.subr.mxu0 0.0
        %966 = vmatpush1.msra.mxu0 0.0
        %967 = vmatprep.subr.mxu0 0.0
        %968 = vmatpush1.msra.mxu0 0.0
        %969 = vmatprep.subr.mxu0 0.0
        %970 = vmatpush1.msra.mxu0 0.0
        %971 = vmatprep.subr.mxu0 0.0
        %972 = vmatpush1.msra.mxu0 0.0
        %973 = vmatprep.subr.mxu0 0.0
        %974 = vmatpush1.msra.mxu0 0.0
        %975 = vmatprep.subr.mxu0 0.0
        %976 = vmatpush1.msra.mxu0 0.0
        %977 = vmatprep.mubr.f32.mxu0 0.0
        %978 = vmatmul.mubr.f32.gmra.mrb[0].mxu0 %v911
        %v979 = vpop.f32.mrb[0].mxu0
        %v980 = vadd.f32 0.0, %v979
        %v981 = vpop.f32.mrb[0].mxu0
        %982 = vdwg.mxu0
        %v983 = vrcp.pop %v901
        %v984 = vmul.f32 %v980, %v983
        %986 = vrot.lane.b32.xlu0 %v984, 8
        %v987 = vpop.permute.xlu0 %986
        %v989 = vsel %vm578, %v775, %v987
        %v990 = vld [vmem:[#allocation13] sm:$0xff]
        %v991 = vld [vmem:[#allocation13 + $0x8] sm:$0xff]
        %v992 = vld [vmem:[#allocation14] sm:$0x1]
        %v994 = vlaneseq
        %v995 = vshrl.u32 %v994, 7
        %v996 = vsub.s32 0, %v995
        %v997 = vrot.slane %v992, %v996
        %v1000 = vsel %vm691, %v989, 0
        %1002 = vmatprep.subr.mxu0 0.0
        %1003 = vmatpush1.msra.mxu0 %v990
        %1004 = vmatprep.subr.mxu0 0.0
        %1005 = vmatpush1.msra.mxu0 %v991
        %1006 = vmatprep.subr.mxu0 0.0
        %1007 = vmatpush1.msra.mxu0 0.0
        %1008 = vmatprep.subr.mxu0 0.0
        %1009 = vmatpush1.msra.mxu0 0.0
        %1010 = vmatprep.subr.mxu0 0.0
        %1011 = vmatpush1.msra.mxu0 0.0
        %1012 = vmatprep.subr.mxu0 0.0
        %1013 = vmatpush1.msra.mxu0 0.0
        %1014 = vmatprep.subr.mxu0 0.0
        %1015 = vmatpush1.msra.mxu0 0.0
        %1016 = vmatprep.subr.mxu0 0.0
        %1017 = vmatpush1.msra.mxu0 0.0
        %1018 = vmatprep.subr.mxu0 0.0
        %1019 = vmatpush1.msra.mxu0 0.0
        %1020 = vmatprep.subr.mxu0 0.0
        %1021 = vmatpush1.msra.mxu0 0.0
        %1022 = vmatprep.subr.mxu0 0.0
        %1023 = vmatpush1.msra.mxu0 0.0
        %1024 = vmatprep.subr.mxu0 0.0
        %1025 = vmatpush1.msra.mxu0 0.0
        %1026 = vmatprep.subr.mxu0 0.0
        %1027 = vmatpush1.msra.mxu0 0.0
        %1028 = vmatprep.subr.mxu0 0.0
        %1029 = vmatpush1.msra.mxu0 0.0
        %1030 = vmatprep.subr.mxu0 0.0
        %1031 = vmatpush1.msra.mxu0 0.0
        %1032 = vmatprep.subr.mxu0 0.0
        %1033 = vmatpush1.msra.mxu0 0.0
        %1034 = vmatprep.subr.mxu0 0.0
        %1035 = vmatpush1.msra.mxu0 0.0
        %1036 = vmatprep.subr.mxu0 0.0
        %1037 = vmatpush1.msra.mxu0 0.0
        %1038 = vmatprep.subr.mxu0 0.0
        %1039 = vmatpush1.msra.mxu0 0.0
        %1040 = vmatprep.subr.mxu0 0.0
        %1041 = vmatpush1.msra.mxu0 0.0
        %1042 = vmatprep.subr.mxu0 0.0
        %1043 = vmatpush1.msra.mxu0 0.0
        %1044 = vmatprep.subr.mxu0 0.0
        %1045 = vmatpush1.msra.mxu0 0.0
        %1046 = vmatprep.subr.mxu0 0.0
        %1047 = vmatpush1.msra.mxu0 0.0
        %1048 = vmatprep.subr.mxu0 0.0
        %1049 = vmatpush1.msra.mxu0 0.0
        %1050 = vmatprep.subr.mxu0 0.0
        %1051 = vmatpush1.msra.mxu0 0.0
        %1052 = vmatprep.subr.mxu0 0.0
        %1053 = vmatpush1.msra.mxu0 0.0
        %1054 = vmatprep.subr.mxu0 0.0
        %1055 = vmatpush1.msra.mxu0 0.0
        %1056 = vmatprep.subr.mxu0 0.0
        %1057 = vmatpush1.msra.mxu0 0.0
        %1058 = vmatprep.subr.mxu0 0.0
        %1059 = vmatpush1.msra.mxu0 0.0
        %1060 = vmatprep.subr.mxu0 0.0
        %1061 = vmatpush1.msra.mxu0 0.0
        %1062 = vmatprep.subr.mxu0 0.0
        %1063 = vmatpush1.msra.mxu0 0.0
        %1064 = vmatprep.subr.mxu0 0.0
        %1065 = vmatpush1.msra.mxu0 0.0
        %1066 = vmatprep.mubr.f32.mxu0 0.0
        %1067 = vmatmul.mubr.f32.gmra.mrb[0].mxu0 %v1000
        %v1068 = vpop.f32.mrb[0].mxu0
        %v1069 = vadd.f32 %v997, %v1068
        %v1070 = vpop.f32.mrb[0].mxu0
        %1071 = vdwg.mxu0
        %1072 = vst [vmem:[%s558] sm:$0xff] %v1069
        %s1073 = sand.u32 %s261, 1
        %s1074 = scalar_lea.sflag [#allocation4], %s1073
        %s1075 = sand.u32 %s261, 1
        %s1076 = smul.addr %s1075, 8
        %s1077 = scalar_lea.vmem [#allocation16], %s1076
        // Predicated region
        $region85: #{tpu_custom_call.1} parent=51 // pred_check
          %p1078 = pneg %p271
        $region86: #{tpu_custom_call.1} parent=51 // pred_check_branch
          %1080 = sbr.rel (%p1078) target = $region88
        $region87: #{tpu_custom_call.1} parent=51 // pred_region
          %s1082 = ssub.s32 128, 128
          %1083 = vsyncadd %s1074, %s1082
          %s1084 = sadd.s32 %s40, %s39
          %s1085 = smul.addr %s1084, 128
          %s1086 = scalar_lea.hbm %s8, %s1085
          %s1088 = sshll.u32 %s1077, 4
          %s1089 = int_to_ptr.vmem [resolvable:$true] %s1088
          %1091 = dma.vmem_to_hbm [thread:$0]  %s1089, 128, %s1086, %s1074
        $region88: #{tpu_custom_call.1} parent=51 // pred_fallthru
          _
      $region52: #{tpu_custom_call.1} parent=5 // pred_fallthru
        _
      %p1092 = scmp.le.s32.totalorder 2, %s30
      // Predicated region
      $region89: #{tpu_custom_call.1} parent=5 // pred_check
        %p1093 = pneg %p1092
      $region90: #{tpu_custom_call.1} parent=5 // pred_check_branch
        %1095 = sbr.rel (%p1093) target = $region92
      $region91: #{tpu_custom_call.1} parent=5 // pred_region
        %s1096 = ssub.s32 %s30, 2
        // Predicated region
        $region93: #{tpu_custom_call.1} parent=91 // pred_check
          %p1097 = pneg %p277
        $region94: #{tpu_custom_call.1} parent=91 // pred_check_branch
          %1099 = sbr.rel (%p1097) target = $region96
        $region95: #{tpu_custom_call.1} parent=91 // pred_region
          %s1100 = sand.u32 %s262, 1
          %s1101 = scalar_lea.sflag [#allocation4], %s1100
          %s1102 = sand.u32 %s262, 1
          %s1103 = smul.addr %s1102, 8
          %s1104 = scalar_lea.vmem [#allocation16], %s1103
          %1105 = dma.done %s1101, 128
        $region96: #{tpu_custom_call.1} parent=91 // pred_fallthru
          _
      $region92: #{tpu_custom_call.1} parent=5 // pred_fallthru
        _
    $region6: #{tpu_custom_call.1} parent=1 // loop_footer
      %s34 = sadd.s32 1, %s30
    $region7: #{tpu_custom_call.1} parent=1 // loop_footer_branch
      %29 = sbr.rel target = $region3
    $region8: #{tpu_custom_call.1} parent=1 // loop_exit
      _
    %1106 = vsyncpa [#allocation3], 1
    %s1107 = scalar_lea.sflag [#allocation3], 1
    %1108 = vsyncpa %s1107, 1
    %1109 = vsyncpa [#allocation6], 1
    %s1110 = scalar_lea.sflag [#allocation6], 1
    %1111 = vsyncpa %s1110, 1
    %1112 = vsyncpa [#allocation9], 1
    %s1113 = scalar_lea.sflag [#allocation9], 1
    %1114 = vsyncpa %s1113, 1
    %1115 = vsyncpa [#allocation12], 1
    %s1116 = scalar_lea.sflag [#allocation12], 1
    %1117 = vsyncpa %s1116, 1
    %1118 = vsyncpa [#allocation15], 1
    %1119 = vsyncpa [#allocation4], 1
    %s1120 = scalar_lea.sflag [#allocation4], 1
    %1121 = vsyncpa %s1120, 1

</llo_original>
